<compile_context>
chip_gen: v7x
topology: tpu7x:2x2x1
jax: 0.10.0
libtpu: 0.0.40
codegen_flags: <defaults>
</compile_context>

<pallas_src>
import functools

import jax
import jax.numpy as jnp
from jax import lax
from jax.experimental import pallas as pl
from jax.experimental.pallas import tpu as pltpu


def _deeponet_kernel(
    # tiled inputs
    xf_ref, xl_ref,
    # branch params (2 hidden tanh layers + final linear -> K*dim)
    bw1_ref, bb1_ref, bw2_ref, bb2_ref, bw3_ref, bb3_ref,
    # trunk params (3 tanh layers, last one -> K, activation applied to all)
    tw1_ref, tb1_ref, tw2_ref, tb2_ref, tw3_ref, tb3_ref,
    # output tile: [dim, TU, TT]
    out_ref,
    *, dim: int, K: int,
):
    f32 = jnp.float32

    # ----- branch MLP hidden layers on the U-tile -----
    z = xf_ref[...]                                                   # [TU, F_b]
    z = jnp.tanh(jnp.dot(z, bw1_ref[...], preferred_element_type=f32) + bb1_ref[...])
    z = jnp.tanh(jnp.dot(z, bw2_ref[...], preferred_element_type=f32) + bb2_ref[...])

    # ----- trunk MLP on the T-tile (activation after every layer, incl. last) -----
    zt = xl_ref[...]                                                  # [TT, F_t]
    zt = jnp.tanh(jnp.dot(zt, tw1_ref[...], preferred_element_type=f32) + tb1_ref[...])
    zt = jnp.tanh(jnp.dot(zt, tw2_ref[...], preferred_element_type=f32) + tb2_ref[...])
    zt = jnp.tanh(jnp.dot(zt, tw3_ref[...], preferred_element_type=f32) + tb3_ref[...])  # [TT, K]

    # ----- final branch layer + K-contraction, per output channel d -----
    # out[u,t,d] = sum_k (z @ bw3 + bb3)[u, d*K+k] * zt[t, k]
    # Static weight slices (free); dot_general contracts K axes directly
    # (no zt.T, no stack); each [TU, TT] slab is written contiguously.
    for d in range(dim):
        zb_d = (jnp.dot(z, bw3_ref[:, d * K:(d + 1) * K], preferred_element_type=f32)
                + bb3_ref[:, d * K:(d + 1) * K])                      # [TU, K]
        out_ref[d] = lax.dot_general(
            zb_d, zt,
            dimension_numbers=(((1,), (1,)), ((), ())),
            preferred_element_type=f32)                               # [TU, TT]


def _pick_tile(n, candidates):
    for c in candidates:
        if n >= c and n % c == 0:
            return c
    return n  # fall back to the full (unblocked) extent


def deeponet_forward(x_func, x_loc, params, *, dim: int, K: int,
                     tu: int | None = None, tt: int | None = None):
    U, Fb = x_func.shape
    T, Ft = x_loc.shape

    # Tile sizes: conservative defaults that fit v7x's smaller VMEM too
    # (per-buffer footprints here are << 1 MiB).  Override via tu/tt.
    TU = tu if tu is not None else _pick_tile(U, (256, 128, 64, 32, 16, 8))
    TT = tt if tt is not None else _pick_tile(T, (512, 256, 128))
    assert U % TU == 0 and T % TT == 0, "demo requires divisible tiles"

    grid = (U // TU, T // TT)

    def resident(arr):
        # Full-array block with a constant index_map: stays in VMEM, no re-DMA.
        shape = arr.shape
        return pl.BlockSpec(shape, lambda i, j, _n=len(shape): (0,) * _n)

    inputs = (
        x_func, x_loc,
        params["bw1"], params["bb1"], params["bw2"], params["bb2"],
        params["bw3"], params["bb3"],
        params["tw1"], params["tb1"], params["tw2"], params["tb2"],
        params["tw3"], params["tb3"],
    )

    in_specs = [
        pl.BlockSpec((TU, Fb), lambda i, j: (i, 0)),   # x_func U-tile
        pl.BlockSpec((TT, Ft), lambda i, j: (j, 0)),   # x_loc  T-tile
    ] + [resident(a) for a in inputs[2:]]

    out_spec = pl.BlockSpec((dim, TU, TT), lambda i, j: (0, i, j))

    out_dUT = pl.pallas_call(
        functools.partial(_deeponet_kernel, dim=dim, K=K),
        grid=grid,
        out_shape=jax.ShapeDtypeStruct((dim, U, T), jnp.float32),
        in_specs=in_specs,
        out_specs=out_spec,
        compiler_params=pltpu.CompilerParams(
            dimension_semantics=("parallel", "parallel")),
    )(*inputs)

    # [dim, U, T] -> [U, T, dim] to match torch.einsum('udK,tK->utd').
    # TODO(synk): a downstream consumer that accepts [dim, U, T] can drop this
    # transpose (one full extra HBM read+write of the output).
    return jnp.transpose(out_dUT, (1, 2, 0))


def _xavier_normal(key, fan_in, fan_out):
    std = (2.0 / (fan_in + fan_out)) ** 0.5
    # stored as [in, out] (transposed vs torch.nn.Linear weight [out, in])
    return std * jax.random.normal(key, (fan_in, fan_out), dtype=jnp.float32)


def init_params(key, layer_sizes_branch, layer_sizes_trunk, K, dim):
    bsizes = list(layer_sizes_branch) + [K * dim]
    tsizes = list(layer_sizes_trunk) + [K]
    assert len(bsizes) == 4 and len(tsizes) == 4, "this script builds 3-layer MLPs"

    keys = jax.random.split(key, 6)
    params = {}
    # branch
    params["bw1"] = _xavier_normal(keys[0], bsizes[0], bsizes[1])
    params["bb1"] = jnp.zeros((1, bsizes[1]), jnp.float32)
    params["bw2"] = _xavier_normal(keys[1], bsizes[1], bsizes[2])
    params["bb2"] = jnp.zeros((1, bsizes[2]), jnp.float32)
    params["bw3"] = _xavier_normal(keys[2], bsizes[2], bsizes[3])
    params["bb3"] = jnp.zeros((1, bsizes[3]), jnp.float32)
    # trunk
    params["tw1"] = _xavier_normal(keys[3], tsizes[0], tsizes[1])
    params["tb1"] = jnp.zeros((1, tsizes[1]), jnp.float32)
    params["tw2"] = _xavier_normal(keys[4], tsizes[1], tsizes[2])
    params["tb2"] = jnp.zeros((1, tsizes[2]), jnp.float32)
    params["tw3"] = _xavier_normal(keys[5], tsizes[2], tsizes[3])
    params["tb3"] = jnp.zeros((1, tsizes[3]), jnp.float32)
    return params


def deeponet_reference(x_func, x_loc, params, *, dim: int, K: int):
    """Pure-JAX reference mirroring the PyTorch forward exactly."""
    z = jnp.tanh(x_func @ params["bw1"] + params["bb1"])
    z = jnp.tanh(z @ params["bw2"] + params["bb2"])
    zb = (z @ params["bw3"] + params["bb3"]).reshape(-1, dim, K)

    zt = jnp.tanh(x_loc @ params["tw1"] + params["tb1"])
    zt = jnp.tanh(zt @ params["tw2"] + params["tb2"])
    zt = jnp.tanh(zt @ params["tw3"] + params["tb3"])

    return jnp.einsum("udK,tK->utd", zb, zt)


if __name__ == "__main__":
    K, dim = 2, 2
    layer_sizes_branch = [16, 32, 32]   # -> final linear 32 -> K*dim = 4
    layer_sizes_trunk = [2, 32, 32]     # -> final layer 32 -> K = 2

    key = jax.random.PRNGKey(0)
    kp, kf, kl = jax.random.split(key, 3)

    params = init_params(kp, layer_sizes_branch, layer_sizes_trunk, K, dim)

    # Small demo shapes, but large enough to exercise a 2x2 grid with
    # lane-dense (128-wide) output tiles.
    U, T = 16, 256
    x_func = jax.random.normal(kf, (U, layer_sizes_branch[0]), dtype=jnp.float32)
    x_loc = jax.random.normal(kl, (T, layer_sizes_trunk[0]), dtype=jnp.float32)

    out = deeponet_forward(x_func, x_loc, params, dim=dim, K=K, tu=8, tt=128)
    out = jax.block_until_ready(out)

    ref = deeponet_reference(x_func, x_loc, params, dim=dim, K=K)
    assert out.shape == (U, T, dim)
    assert bool(jnp.allclose(out, ref, atol=1e-5, rtol=1e-5)), "mismatch vs reference"

    print("KERNEL_OK")
</pallas_src>

<mosaic_0001>
module attributes {stable_mosaic.version = 11 : i64} {
  func.func @_deeponet_kernel(%arg0: i32, %arg1: i32, %arg2: memref<8x16xf32, #tpu.memory_space<vmem>>, %arg3: memref<128x2xf32, #tpu.memory_space<vmem>>, %arg4: memref<16x32xf32, #tpu.memory_space<vmem>>, %arg5: memref<1x32xf32, #tpu.memory_space<vmem>>, %arg6: memref<32x32xf32, #tpu.memory_space<vmem>>, %arg7: memref<1x32xf32, #tpu.memory_space<vmem>>, %arg8: memref<32x4xf32, #tpu.memory_space<vmem>>, %arg9: memref<1x4xf32, #tpu.memory_space<vmem>>, %arg10: memref<2x32xf32, #tpu.memory_space<vmem>>, %arg11: memref<1x32xf32, #tpu.memory_space<vmem>>, %arg12: memref<32x32xf32, #tpu.memory_space<vmem>>, %arg13: memref<1x32xf32, #tpu.memory_space<vmem>>, %arg14: memref<32x2xf32, #tpu.memory_space<vmem>>, %arg15: memref<1x2xf32, #tpu.memory_space<vmem>>, %arg16: memref<2x8x128xf32, #tpu.memory_space<vmem>>) attributes {dimension_semantics = [#tpu.dimension_semantics<parallel>, #tpu.dimension_semantics<parallel>], iteration_bounds = array<i64: 2, 2>, scalar_prefetch = 0 : i64, scratch_operands = 0 : i64, tpu.core_type = #tpu.core_type<tc>, window_params = [{transform_indices = @transform_0, window_bounds = array<i64: 8, 16>}, {transform_indices = @transform_1, window_bounds = array<i64: 128, 2>}, {pipeline_mode = #tpu.pipeline_mode<synchronous>, transform_indices = @transform_2, window_bounds = array<i64: 16, 32>}, {pipeline_mode = #tpu.pipeline_mode<synchronous>, transform_indices = @transform_3, window_bounds = array<i64: 1, 32>}, {pipeline_mode = #tpu.pipeline_mode<synchronous>, transform_indices = @transform_4, window_bounds = array<i64: 32, 32>}, {pipeline_mode = #tpu.pipeline_mode<synchronous>, transform_indices = @transform_5, window_bounds = array<i64: 1, 32>}, {pipeline_mode = #tpu.pipeline_mode<synchronous>, transform_indices = @transform_6, window_bounds = array<i64: 32, 4>}, {pipeline_mode = #tpu.pipeline_mode<synchronous>, transform_indices = @transform_7, window_bounds = array<i64: 1, 4>}, {pipeline_mode = #tpu.pipeline_mode<synchronous>, transform_indices = @transform_8, window_bounds = array<i64: 2, 32>}, {pipeline_mode = #tpu.pipeline_mode<synchronous>, transform_indices = @transform_9, window_bounds = array<i64: 1, 32>}, {pipeline_mode = #tpu.pipeline_mode<synchronous>, transform_indices = @transform_10, window_bounds = array<i64: 32, 32>}, {pipeline_mode = #tpu.pipeline_mode<synchronous>, transform_indices = @transform_11, window_bounds = array<i64: 1, 32>}, {pipeline_mode = #tpu.pipeline_mode<synchronous>, transform_indices = @transform_12, window_bounds = array<i64: 32, 2>}, {pipeline_mode = #tpu.pipeline_mode<synchronous>, transform_indices = @transform_13, window_bounds = array<i64: 1, 2>}, {transform_indices = @transform_14, window_bounds = array<i64: 2, 8, 128>}]} {
    %c0 = arith.constant 0 : index
    %c0_0 = arith.constant 0 : index
    %0 = vector.load %arg2[%c0, %c0_0] : memref<8x16xf32, #tpu.memory_space<vmem>>, vector<8x16xf32>
    %c0_1 = arith.constant 0 : index
    %c0_2 = arith.constant 0 : index
    %1 = vector.load %arg4[%c0_1, %c0_2] : memref<16x32xf32, #tpu.memory_space<vmem>>, vector<16x32xf32>
    %cst = arith.constant dense<0.000000e+00> : vector<8x32xf32>
    %2 = tpu.matmul %0, %1, %cst {dimension_numbers = #tpu.dot_dimension_numbers<[1], [0], [0], [1], [0, 0, 1, 1], [], []>} : vector<8x16xf32>, vector<16x32xf32>, vector<8x32xf32> -> vector<8x32xf32>
    %c0_3 = arith.constant 0 : index
    %c0_4 = arith.constant 0 : index
    %3 = vector.load %arg5[%c0_3, %c0_4] : memref<1x32xf32, #tpu.memory_space<vmem>>, vector<1x32xf32>
    %4 = vector.broadcast %3 : vector<1x32xf32> to vector<8x32xf32>
    %5 = arith.addf %2, %4 : vector<8x32xf32>
    %6 = math.tanh %5 : vector<8x32xf32>
    %c0_5 = arith.constant 0 : index
    %c0_6 = arith.constant 0 : index
    %7 = vector.load %arg6[%c0_5, %c0_6] : memref<32x32xf32, #tpu.memory_space<vmem>>, vector<32x32xf32>
    %cst_7 = arith.constant dense<0.000000e+00> : vector<8x32xf32>
    %8 = tpu.matmul %6, %7, %cst_7 {dimension_numbers = #tpu.dot_dimension_numbers<[1], [0], [0], [1], [0, 0, 1, 1], [], []>} : vector<8x32xf32>, vector<32x32xf32>, vector<8x32xf32> -> vector<8x32xf32>
    %c0_8 = arith.constant 0 : index
    %c0_9 = arith.constant 0 : index
    %9 = vector.load %arg7[%c0_8, %c0_9] : memref<1x32xf32, #tpu.memory_space<vmem>>, vector<1x32xf32>
    %10 = vector.broadcast %9 : vector<1x32xf32> to vector<8x32xf32>
    %11 = arith.addf %8, %10 : vector<8x32xf32>
    %12 = math.tanh %11 : vector<8x32xf32>
    %c0_10 = arith.constant 0 : index
    %c0_11 = arith.constant 0 : index
    %13 = vector.load %arg3[%c0_10, %c0_11] : memref<128x2xf32, #tpu.memory_space<vmem>>, vector<128x2xf32>
    %c0_12 = arith.constant 0 : index
    %c0_13 = arith.constant 0 : index
    %14 = vector.load %arg10[%c0_12, %c0_13] : memref<2x32xf32, #tpu.memory_space<vmem>>, vector<2x32xf32>
    %cst_14 = arith.constant dense<0.000000e+00> : vector<128x32xf32>
    %15 = tpu.matmul %13, %14, %cst_14 {dimension_numbers = #tpu.dot_dimension_numbers<[1], [0], [0], [1], [0, 0, 1, 1], [], []>} : vector<128x2xf32>, vector<2x32xf32>, vector<128x32xf32> -> vector<128x32xf32>
    %c0_15 = arith.constant 0 : index
    %c0_16 = arith.constant 0 : index
    %16 = vector.load %arg11[%c0_15, %c0_16] : memref<1x32xf32, #tpu.memory_space<vmem>>, vector<1x32xf32>
    %17 = vector.broadcast %16 : vector<1x32xf32> to vector<128x32xf32>
    %18 = arith.addf %15, %17 : vector<128x32xf32>
    %19 = math.tanh %18 : vector<128x32xf32>
    %c0_17 = arith.constant 0 : index
    %c0_18 = arith.constant 0 : index
    %20 = vector.load %arg12[%c0_17, %c0_18] : memref<32x32xf32, #tpu.memory_space<vmem>>, vector<32x32xf32>
    %cst_19 = arith.constant dense<0.000000e+00> : vector<128x32xf32>
    %21 = tpu.matmul %19, %20, %cst_19 {dimension_numbers = #tpu.dot_dimension_numbers<[1], [0], [0], [1], [0, 0, 1, 1], [], []>} : vector<128x32xf32>, vector<32x32xf32>, vector<128x32xf32> -> vector<128x32xf32>
    %c0_20 = arith.constant 0 : index
    %c0_21 = arith.constant 0 : index
    %22 = vector.load %arg13[%c0_20, %c0_21] : memref<1x32xf32, #tpu.memory_space<vmem>>, vector<1x32xf32>
    %23 = vector.broadcast %22 : vector<1x32xf32> to vector<128x32xf32>
    %24 = arith.addf %21, %23 : vector<128x32xf32>
    %25 = math.tanh %24 : vector<128x32xf32>
    %c0_22 = arith.constant 0 : index
    %c0_23 = arith.constant 0 : index
    %26 = vector.load %arg14[%c0_22, %c0_23] : memref<32x2xf32, #tpu.memory_space<vmem>>, vector<32x2xf32>
    %cst_24 = arith.constant dense<0.000000e+00> : vector<128x2xf32>
    %27 = tpu.matmul %25, %26, %cst_24 {dimension_numbers = #tpu.dot_dimension_numbers<[1], [0], [0], [1], [0, 0, 1, 1], [], []>} : vector<128x32xf32>, vector<32x2xf32>, vector<128x2xf32> -> vector<128x2xf32>
    %c0_25 = arith.constant 0 : index
    %c0_26 = arith.constant 0 : index
    %28 = vector.load %arg15[%c0_25, %c0_26] : memref<1x2xf32, #tpu.memory_space<vmem>>, vector<1x2xf32>
    %29 = vector.broadcast %28 : vector<1x2xf32> to vector<128x2xf32>
    %30 = arith.addf %27, %29 : vector<128x2xf32>
    %31 = math.tanh %30 : vector<128x2xf32>
    %c0_27 = arith.constant 0 : index
    %c0_28 = arith.constant 0 : index
    %32 = vector.load %arg8[%c0_27, %c0_28] : memref<32x4xf32, #tpu.memory_space<vmem>>, vector<32x2xf32>
    %cst_29 = arith.constant dense<0.000000e+00> : vector<8x2xf32>
    %33 = tpu.matmul %12, %32, %cst_29 {dimension_numbers = #tpu.dot_dimension_numbers<[1], [0], [0], [1], [0, 0, 1, 1], [], []>} : vector<8x32xf32>, vector<32x2xf32>, vector<8x2xf32> -> vector<8x2xf32>
    %c0_30 = arith.constant 0 : index
    %c0_31 = arith.constant 0 : index
    %34 = vector.load %arg9[%c0_30, %c0_31] : memref<1x4xf32, #tpu.memory_space<vmem>>, vector<1x2xf32>
    %35 = vector.broadcast %34 : vector<1x2xf32> to vector<8x2xf32>
    %36 = arith.addf %33, %35 : vector<8x2xf32>
    %cst_32 = arith.constant dense<0.000000e+00> : vector<8x128xf32>
    %37 = tpu.matmul %36, %31, %cst_32 {dimension_numbers = #tpu.dot_dimension_numbers<[1], [1], [0], [0], [0, 0, 1, 0], [], []>} : vector<8x2xf32>, vector<128x2xf32>, vector<8x128xf32> -> vector<8x128xf32>
    %c0_33 = arith.constant 0 : index
    %c0_34 = arith.constant 0 : index
    %c0_35 = arith.constant 0 : index
    %38 = vector.load %arg16[%c0_33, %c0_34, %c0_35] : memref<2x8x128xf32, #tpu.memory_space<vmem>>, vector<1x8x128xf32>
    %39 = vector.shape_cast %38 : vector<1x8x128xf32> to vector<8x128xf32>
    %40 = vector.shape_cast %37 : vector<8x128xf32> to vector<1x8x128xf32>
    tpu.vector_store %arg16[%c0_33, %c0_34, %c0_35], %40 {strides = array<i32>} : memref<2x8x128xf32, #tpu.memory_space<vmem>>, vector<1x8x128xf32>,
    %c0_36 = arith.constant 0 : index
    %c2 = arith.constant 2 : index
    %41 = vector.load %arg8[%c0_36, %c2] : memref<32x4xf32, #tpu.memory_space<vmem>>, vector<32x2xf32>
    %cst_37 = arith.constant dense<0.000000e+00> : vector<8x2xf32>
    %42 = tpu.matmul %12, %41, %cst_37 {dimension_numbers = #tpu.dot_dimension_numbers<[1], [0], [0], [1], [0, 0, 1, 1], [], []>} : vector<8x32xf32>, vector<32x2xf32>, vector<8x2xf32> -> vector<8x2xf32>
    %c0_38 = arith.constant 0 : index
    %c2_39 = arith.constant 2 : index
    %43 = vector.load %arg9[%c0_38, %c2_39] : memref<1x4xf32, #tpu.memory_space<vmem>>, vector<1x2xf32>
    %44 = vector.broadcast %43 : vector<1x2xf32> to vector<8x2xf32>
    %45 = arith.addf %42, %44 : vector<8x2xf32>
    %cst_40 = arith.constant dense<0.000000e+00> : vector<8x128xf32>
    %46 = tpu.matmul %45, %31, %cst_40 {dimension_numbers = #tpu.dot_dimension_numbers<[1], [1], [0], [0], [0, 0, 1, 0], [], []>} : vector<8x2xf32>, vector<128x2xf32>, vector<8x128xf32> -> vector<8x128xf32>
    %c1 = arith.constant 1 : index
    %c0_41 = arith.constant 0 : index
    %c0_42 = arith.constant 0 : index
    %47 = vector.load %arg16[%c1, %c0_41, %c0_42] : memref<2x8x128xf32, #tpu.memory_space<vmem>>, vector<1x8x128xf32>
    %48 = vector.shape_cast %47 : vector<1x8x128xf32> to vector<8x128xf32>
    %49 = vector.shape_cast %46 : vector<8x128xf32> to vector<1x8x128xf32>
    tpu.vector_store %arg16[%c1, %c0_41, %c0_42], %49 {strides = array<i32>} : memref<2x8x128xf32, #tpu.memory_space<vmem>>, vector<1x8x128xf32>,
    return
  }
  func.func @transform_0(%arg0: i32, %arg1: i32) -> (i32, i32) {
    %c0_i32 = arith.constant 0 : i32
    %c0_i32_0 = arith.constant 0 : i32
    return %arg0, %c0_i32 : i32, i32
  }
  func.func @transform_1(%arg0: i32, %arg1: i32) -> (i32, i32) {
    %c0_i32 = arith.constant 0 : i32
    %c0_i32_0 = arith.constant 0 : i32
    return %arg1, %c0_i32 : i32, i32
  }
  func.func @transform_2(%arg0: i32, %arg1: i32) -> (i32, i32) {
    %c0_i32 = arith.constant 0 : i32
    %c0_i32_0 = arith.constant 0 : i32
    %c0_i32_1 = arith.constant 0 : i32
    return %c0_i32, %c0_i32_0 : i32, i32
  }
  func.func @transform_3(%arg0: i32, %arg1: i32) -> (i32, i32) {
    %c0_i32 = arith.constant 0 : i32
    %c0_i32_0 = arith.constant 0 : i32
    %c0_i32_1 = arith.constant 0 : i32
    return %c0_i32, %c0_i32_0 : i32, i32
  }
  func.func @transform_4(%arg0: i32, %arg1: i32) -> (i32, i32) {
    %c0_i32 = arith.constant 0 : i32
    %c0_i32_0 = arith.constant 0 : i32
    %c0_i32_1 = arith.constant 0 : i32
    return %c0_i32, %c0_i32_0 : i32, i32
  }
  func.func @transform_5(%arg0: i32, %arg1: i32) -> (i32, i32) {
    %c0_i32 = arith.constant 0 : i32
    %c0_i32_0 = arith.constant 0 : i32
    %c0_i32_1 = arith.constant 0 : i32
    return %c0_i32, %c0_i32_0 : i32, i32
  }
  func.func @transform_6(%arg0: i32, %arg1: i32) -> (i32, i32) {
    %c0_i32 = arith.constant 0 : i32
    %c0_i32_0 = arith.constant 0 : i32
    %c0_i32_1 = arith.constant 0 : i32
    return %c0_i32, %c0_i32_0 : i32, i32
  }
  func.func @transform_7(%arg0: i32, %arg1: i32) -> (i32, i32) {
    %c0_i32 = arith.constant 0 : i32
    %c0_i32_0 = arith.constant 0 : i32
    %c0_i32_1 = arith.constant 0 : i32
    return %c0_i32, %c0_i32_0 : i32, i32
  }
  func.func @transform_8(%arg0: i32, %arg1: i32) -> (i32, i32) {
    %c0_i32 = arith.constant 0 : i32
    %c0_i32_0 = arith.constant 0 : i32
    %c0_i32_1 = arith.constant 0 : i32
    return %c0_i32, %c0_i32_0 : i32, i32
  }
  func.func @transform_9(%arg0: i32, %arg1: i32) -> (i32, i32) {
    %c0_i32 = arith.constant 0 : i32
    %c0_i32_0 = arith.constant 0 : i32
    %c0_i32_1 = arith.constant 0 : i32
    return %c0_i32, %c0_i32_0 : i32, i32
  }
  func.func @transform_10(%arg0: i32, %arg1: i32) -> (i32, i32) {
    %c0_i32 = arith.constant 0 : i32
    %c0_i32_0 = arith.constant 0 : i32
    %c0_i32_1 = arith.constant 0 : i32
    return %c0_i32, %c0_i32_0 : i32, i32
  }
  func.func @transform_11(%arg0: i32, %arg1: i32) -> (i32, i32) {
    %c0_i32 = arith.constant 0 : i32
    %c0_i32_0 = arith.constant 0 : i32
    %c0_i32_1 = arith.constant 0 : i32
    return %c0_i32, %c0_i32_0 : i32, i32
  }
  func.func @transform_12(%arg0: i32, %arg1: i32) -> (i32, i32) {
    %c0_i32 = arith.constant 0 : i32
    %c0_i32_0 = arith.constant 0 : i32
    %c0_i32_1 = arith.constant 0 : i32
    return %c0_i32, %c0_i32_0 : i32, i32
  }
  func.func @transform_13(%arg0: i32, %arg1: i32) -> (i32, i32) {
    %c0_i32 = arith.constant 0 : i32
    %c0_i32_0 = arith.constant 0 : i32
    %c0_i32_1 = arith.constant 0 : i32
    return %c0_i32, %c0_i32_0 : i32, i32
  }
  func.func @transform_14(%arg0: i32, %arg1: i32) -> (i32, i32, i32) {
    %c0_i32 = arith.constant 0 : i32
    %c0_i32_0 = arith.constant 0 : i32
    return %c0_i32, %arg0, %arg1 : i32, i32, i32
  }
}

</mosaic_0001>

<llo_original>
// kernel: tpu_custom_call.1
$region0: #{tpu_custom_call.1}
  #allocation0 [shape = 'u32[]', space=smem, size = 0x4, offset = 0x4, fixed_abs, tag = 'smem constant byte address 0x4 - core index']
  #allocation1 [shape = 'u32[144,128]{1,0:T(1,128)}', space=vmem, size = 0x12000, scoped, tag = 'internal scratch']
  %s0 = inlined_call_operand.vmem [shape: f32[16,16], index: 0, kind: input, shape index: {}]
  %s1 = inlined_call_operand.vmem [shape: f32[256,2], index: 1, kind: input, shape index: {}]
  %s2 = inlined_call_operand.vmem [shape: f32[16,32], index: 2, kind: input, shape index: {}]
  %s3 = inlined_call_operand.vmem [shape: f32[1,32], index: 3, kind: input, shape index: {}]
  %s4 = inlined_call_operand.vmem [shape: f32[32,32], index: 4, kind: input, shape index: {}]
  %s5 = inlined_call_operand.vmem [shape: f32[1,32], index: 5, kind: input, shape index: {}]
  %s6 = inlined_call_operand.vmem [shape: f32[32,4], index: 6, kind: input, shape index: {}]
  %s7 = inlined_call_operand.vmem [shape: f32[1,4], index: 7, kind: input, shape index: {}]
  %s8 = inlined_call_operand.vmem [shape: f32[2,32], index: 8, kind: input, shape index: {}]
  %s9 = inlined_call_operand.vmem [shape: f32[1,32], index: 9, kind: input, shape index: {}]
  %s10 = inlined_call_operand.vmem [shape: f32[32,32], index: 10, kind: input, shape index: {}]
  %s11 = inlined_call_operand.vmem [shape: f32[1,32], index: 11, kind: input, shape index: {}]
  %s12 = inlined_call_operand.vmem [shape: f32[32,2], index: 12, kind: input, shape index: {}]
  %s13 = inlined_call_operand.vmem [shape: f32[1,2], index: 13, kind: input, shape index: {}]
  %s14 = inlined_call_operand.hbm [shape: f32[2,16,256], index: 14, kind: output, shape index: {}]
  %s15 = sld [smem:[#allocation0]]
  $region89: #{tpu_custom_call.1} parent=0
    _
  %s17 = ssub.s32 1, %s15
  %s18 = scalar_select 0, %s17, %s15
  $region1: #{tpu_custom_call.1} parent=0
    #allocation2 [shape = 'u8[16384]{0}', space=vmem, size = 0x4000, scoped, tag = 'output window, operand 0']
    #allocation3 [shape = 's32[2]{0}', space=sflag, size = 0x8, scoped, tag = 'scoped memory for tpu_custom_call.1']
    %19 = vsyncpa [#allocation3], 0
    %s20 = scalar_lea.sflag [#allocation3], 1
    %21 = vsyncpa %s20, 0
    loop: start=0, step=1, limit=6
    $region2: #{tpu_custom_call.1} parent=1 // loop_pre_header
      _
    $region3: #{tpu_custom_call.1} parent=1 // loop_header
      %s23 = sphi 0, %s27
      %p24 = scmp.ge.s32.totalorder %s23, 6
      %s30 = sphi 0, %s42
      %s31 = sphi 0, %s38
      %s32 = sphi 0, %s30
      %s33 = sphi 0, %s31
      %s34 = sphi 0, %s32
      %s35 = sphi 0, %s33
      %s45 = sphi 0, %s47
      %s48 = sphi 0, %s45
      %s49 = sphi 0, %s48
      %s65 = sphi 0, %s49
      %s71 = sphi 0, %s73
      %s74 = sphi 0, %s71
      %s75 = sphi 0, %s74
      %s91 = sphi 0, %s75
      %s95 = sphi 0, %s95
      %s97 = sphi 0, %s95
      %s98 = sphi 0, %s97
      %s112 = sphi 0, %s98
      %s116 = sphi 0, %s116
      %s118 = sphi 0, %s116
      %s119 = sphi 0, %s118
      %s133 = sphi 0, %s119
      %s137 = sphi 0, %s137
      %s139 = sphi 0, %s137
      %s140 = sphi 0, %s139
      %s154 = sphi 0, %s140
      %s158 = sphi 0, %s158
      %s160 = sphi 0, %s158
      %s161 = sphi 0, %s160
      %s175 = sphi 0, %s161
      %s179 = sphi 0, %s179
      %s181 = sphi 0, %s179
      %s182 = sphi 0, %s181
      %s196 = sphi 0, %s182
      %s200 = sphi 0, %s200
      %s202 = sphi 0, %s200
      %s203 = sphi 0, %s202
      %s217 = sphi 0, %s203
      %s221 = sphi 0, %s221
      %s223 = sphi 0, %s221
      %s224 = sphi 0, %s223
      %s238 = sphi 0, %s224
      %s242 = sphi 0, %s242
      %s244 = sphi 0, %s242
      %s245 = sphi 0, %s244
      %s259 = sphi 0, %s245
      %s263 = sphi 0, %s263
      %s265 = sphi 0, %s263
      %s266 = sphi 0, %s265
      %s280 = sphi 0, %s266
      %s284 = sphi 0, %s284
      %s286 = sphi 0, %s284
      %s287 = sphi 0, %s286
      %s301 = sphi 0, %s287
      %s305 = sphi 0, %s305
      %s307 = sphi 0, %s305
      %s308 = sphi 0, %s307
      %s322 = sphi 0, %s308
      %s326 = sphi 0, %s326
      %s328 = sphi 0, %s326
      %s329 = sphi 0, %s328
      %s343 = sphi 0, %s329
      %s351 = sphi 0, %s353
      %s354 = sphi 0, %s351
      %s355 = sphi 0, %s354
      %s371 = sphi 0, %s355
    $region4: #{tpu_custom_call.1} parent=1 // loop_header_branch
      %26 = sbr.rel (%p24) target = $region8
    $region5: #{tpu_custom_call.1} parent=1 // loop_body
      %s28 = ssub.s32 %s23, 1
      %s29 = ssub.s32 %s23, 2
      %s36 = sadd.s32 1, %s31
      %p37 = scmp.ge.s32.totalorder %s36, 2
      %s38 = scalar_select %p37, 0, %s36
      %s39 = sadd.s32 1, %s30
      %s40 = scalar_select %p37, %s39, %s30
      %p41 = scmp.ge.s32.totalorder %s40, 2
      %s42 = scalar_select %p41, 0, %s40
      %s43 = ssub.s32 %s30, %s42
      %p44 = scmp.eq.s32.totalorder %s43, 0
      %s46 = sadd.s32 %s45, 1
      %s47 = scalar_select %p44, %s45, %s46
      %p50 = pneg %p44
      %p51 = scmp.eq.s32.totalorder %s23, 3
      %p52 = por %p50, %p51
      %p53 = scmp.ne.s32.totalorder %s45, %s48
      %p54 = scmp.eq.s32.totalorder %s23, 0
      %p55 = por %p53, %p54
      %p56 = scmp.ne.s32.totalorder %s45, %s48
      %p57 = scmp.eq.s32.totalorder %s28, 3
      %p58 = por %p56, %p57
      %p59 = scmp.ne.s32.totalorder %s48, %s49
      %p60 = scmp.eq.s32.totalorder %s28, 0
      %p61 = por %p59, %p60
      %p62 = scmp.ne.s32.totalorder %s48, %s49
      %p63 = scmp.eq.s32.totalorder %s29, 3
      %p64 = por %p62, %p63
      %p66 = scmp.ne.s32.totalorder %s49, %s65
      %p67 = scmp.eq.s32.totalorder %s29, 0
      %p68 = por %p66, %p67
      %s69 = ssub.s32 %s31, %s38
      %p70 = scmp.eq.s32.totalorder %s69, 0
      %s72 = sadd.s32 %s71, 1
      %s73 = scalar_select %p70, %s71, %s72
      %p76 = pneg %p70
      %p77 = scmp.eq.s32.totalorder %s23, 3
      %p78 = por %p76, %p77
      %p79 = scmp.ne.s32.totalorder %s71, %s74
      %p80 = scmp.eq.s32.totalorder %s23, 0
      %p81 = por %p79, %p80
      %p82 = scmp.ne.s32.totalorder %s71, %s74
      %p83 = scmp.eq.s32.totalorder %s28, 3
      %p84 = por %p82, %p83
      %p85 = scmp.ne.s32.totalorder %s74, %s75
      %p86 = scmp.eq.s32.totalorder %s28, 0
      %p87 = por %p85, %p86
      %p88 = scmp.ne.s32.totalorder %s74, %s75
      %p89 = scmp.eq.s32.totalorder %s29, 3
      %p90 = por %p88, %p89
      %p92 = scmp.ne.s32.totalorder %s75, %s91
      %p93 = scmp.eq.s32.totalorder %s29, 0
      %p94 = por %p92, %p93
      %s96 = sadd.s32 %s95, 1
      %p99 = scmp.eq.s32.totalorder %s23, 3
      %p100 = scmp.ne.s32.totalorder %s95, %s97
      %p101 = scmp.eq.s32.totalorder %s23, 0
      %p102 = por %p100, %p101
      %p103 = scmp.ne.s32.totalorder %s95, %s97
      %p104 = scmp.eq.s32.totalorder %s28, 3
      %p105 = por %p103, %p104
      %p106 = scmp.ne.s32.totalorder %s97, %s98
      %p107 = scmp.eq.s32.totalorder %s28, 0
      %p108 = por %p106, %p107
      %p109 = scmp.ne.s32.totalorder %s97, %s98
      %p110 = scmp.eq.s32.totalorder %s29, 3
      %p111 = por %p109, %p110
      %p113 = scmp.ne.s32.totalorder %s98, %s112
      %p114 = scmp.eq.s32.totalorder %s29, 0
      %p115 = por %p113, %p114
      %s117 = sadd.s32 %s116, 1
      %p120 = scmp.eq.s32.totalorder %s23, 3
      %p121 = scmp.ne.s32.totalorder %s116, %s118
      %p122 = scmp.eq.s32.totalorder %s23, 0
      %p123 = por %p121, %p122
      %p124 = scmp.ne.s32.totalorder %s116, %s118
      %p125 = scmp.eq.s32.totalorder %s28, 3
      %p126 = por %p124, %p125
      %p127 = scmp.ne.s32.totalorder %s118, %s119
      %p128 = scmp.eq.s32.totalorder %s28, 0
      %p129 = por %p127, %p128
      %p130 = scmp.ne.s32.totalorder %s118, %s119
      %p131 = scmp.eq.s32.totalorder %s29, 3
      %p132 = por %p130, %p131
      %p134 = scmp.ne.s32.totalorder %s119, %s133
      %p135 = scmp.eq.s32.totalorder %s29, 0
      %p136 = por %p134, %p135
      %s138 = sadd.s32 %s137, 1
      %p141 = scmp.eq.s32.totalorder %s23, 3
      %p142 = scmp.ne.s32.totalorder %s137, %s139
      %p143 = scmp.eq.s32.totalorder %s23, 0
      %p144 = por %p142, %p143
      %p145 = scmp.ne.s32.totalorder %s137, %s139
      %p146 = scmp.eq.s32.totalorder %s28, 3
      %p147 = por %p145, %p146
      %p148 = scmp.ne.s32.totalorder %s139, %s140
      %p149 = scmp.eq.s32.totalorder %s28, 0
      %p150 = por %p148, %p149
      %p151 = scmp.ne.s32.totalorder %s139, %s140
      %p152 = scmp.eq.s32.totalorder %s29, 3
      %p153 = por %p151, %p152
      %p155 = scmp.ne.s32.totalorder %s140, %s154
      %p156 = scmp.eq.s32.totalorder %s29, 0
      %p157 = por %p155, %p156
      %s159 = sadd.s32 %s158, 1
      %p162 = scmp.eq.s32.totalorder %s23, 3
      %p163 = scmp.ne.s32.totalorder %s158, %s160
      %p164 = scmp.eq.s32.totalorder %s23, 0
      %p165 = por %p163, %p164
      %p166 = scmp.ne.s32.totalorder %s158, %s160
      %p167 = scmp.eq.s32.totalorder %s28, 3
      %p168 = por %p166, %p167
      %p169 = scmp.ne.s32.totalorder %s160, %s161
      %p170 = scmp.eq.s32.totalorder %s28, 0
      %p171 = por %p169, %p170
      %p172 = scmp.ne.s32.totalorder %s160, %s161
      %p173 = scmp.eq.s32.totalorder %s29, 3
      %p174 = por %p172, %p173
      %p176 = scmp.ne.s32.totalorder %s161, %s175
      %p177 = scmp.eq.s32.totalorder %s29, 0
      %p178 = por %p176, %p177
      %s180 = sadd.s32 %s179, 1
      %p183 = scmp.eq.s32.totalorder %s23, 3
      %p184 = scmp.ne.s32.totalorder %s179, %s181
      %p185 = scmp.eq.s32.totalorder %s23, 0
      %p186 = por %p184, %p185
      %p187 = scmp.ne.s32.totalorder %s179, %s181
      %p188 = scmp.eq.s32.totalorder %s28, 3
      %p189 = por %p187, %p188
      %p190 = scmp.ne.s32.totalorder %s181, %s182
      %p191 = scmp.eq.s32.totalorder %s28, 0
      %p192 = por %p190, %p191
      %p193 = scmp.ne.s32.totalorder %s181, %s182
      %p194 = scmp.eq.s32.totalorder %s29, 3
      %p195 = por %p193, %p194
      %p197 = scmp.ne.s32.totalorder %s182, %s196
      %p198 = scmp.eq.s32.totalorder %s29, 0
      %p199 = por %p197, %p198
      %s201 = sadd.s32 %s200, 1
      %p204 = scmp.eq.s32.totalorder %s23, 3
      %p205 = scmp.ne.s32.totalorder %s200, %s202
      %p206 = scmp.eq.s32.totalorder %s23, 0
      %p207 = por %p205, %p206
      %p208 = scmp.ne.s32.totalorder %s200, %s202
      %p209 = scmp.eq.s32.totalorder %s28, 3
      %p210 = por %p208, %p209
      %p211 = scmp.ne.s32.totalorder %s202, %s203
      %p212 = scmp.eq.s32.totalorder %s28, 0
      %p213 = por %p211, %p212
      %p214 = scmp.ne.s32.totalorder %s202, %s203
      %p215 = scmp.eq.s32.totalorder %s29, 3
      %p216 = por %p214, %p215
      %p218 = scmp.ne.s32.totalorder %s203, %s217
      %p219 = scmp.eq.s32.totalorder %s29, 0
      %p220 = por %p218, %p219
      %s222 = sadd.s32 %s221, 1
      %p225 = scmp.eq.s32.totalorder %s23, 3
      %p226 = scmp.ne.s32.totalorder %s221, %s223
      %p227 = scmp.eq.s32.totalorder %s23, 0
      %p228 = por %p226, %p227
      %p229 = scmp.ne.s32.totalorder %s221, %s223
      %p230 = scmp.eq.s32.totalorder %s28, 3
      %p231 = por %p229, %p230
      %p232 = scmp.ne.s32.totalorder %s223, %s224
      %p233 = scmp.eq.s32.totalorder %s28, 0
      %p234 = por %p232, %p233
      %p235 = scmp.ne.s32.totalorder %s223, %s224
      %p236 = scmp.eq.s32.totalorder %s29, 3
      %p237 = por %p235, %p236
      %p239 = scmp.ne.s32.totalorder %s224, %s238
      %p240 = scmp.eq.s32.totalorder %s29, 0
      %p241 = por %p239, %p240
      %s243 = sadd.s32 %s242, 1
      %p246 = scmp.eq.s32.totalorder %s23, 3
      %p247 = scmp.ne.s32.totalorder %s242, %s244
      %p248 = scmp.eq.s32.totalorder %s23, 0
      %p249 = por %p247, %p248
      %p250 = scmp.ne.s32.totalorder %s242, %s244
      %p251 = scmp.eq.s32.totalorder %s28, 3
      %p252 = por %p250, %p251
      %p253 = scmp.ne.s32.totalorder %s244, %s245
      %p254 = scmp.eq.s32.totalorder %s28, 0
      %p255 = por %p253, %p254
      %p256 = scmp.ne.s32.totalorder %s244, %s245
      %p257 = scmp.eq.s32.totalorder %s29, 3
      %p258 = por %p256, %p257
      %p260 = scmp.ne.s32.totalorder %s245, %s259
      %p261 = scmp.eq.s32.totalorder %s29, 0
      %p262 = por %p260, %p261
      %s264 = sadd.s32 %s263, 1
      %p267 = scmp.eq.s32.totalorder %s23, 3
      %p268 = scmp.ne.s32.totalorder %s263, %s265
      %p269 = scmp.eq.s32.totalorder %s23, 0
      %p270 = por %p268, %p269
      %p271 = scmp.ne.s32.totalorder %s263, %s265
      %p272 = scmp.eq.s32.totalorder %s28, 3
      %p273 = por %p271, %p272
      %p274 = scmp.ne.s32.totalorder %s265, %s266
      %p275 = scmp.eq.s32.totalorder %s28, 0
      %p276 = por %p274, %p275
      %p277 = scmp.ne.s32.totalorder %s265, %s266
      %p278 = scmp.eq.s32.totalorder %s29, 3
      %p279 = por %p277, %p278
      %p281 = scmp.ne.s32.totalorder %s266, %s280
      %p282 = scmp.eq.s32.totalorder %s29, 0
      %p283 = por %p281, %p282
      %s285 = sadd.s32 %s284, 1
      %p288 = scmp.eq.s32.totalorder %s23, 3
      %p289 = scmp.ne.s32.totalorder %s284, %s286
      %p290 = scmp.eq.s32.totalorder %s23, 0
      %p291 = por %p289, %p290
      %p292 = scmp.ne.s32.totalorder %s284, %s286
      %p293 = scmp.eq.s32.totalorder %s28, 3
      %p294 = por %p292, %p293
      %p295 = scmp.ne.s32.totalorder %s286, %s287
      %p296 = scmp.eq.s32.totalorder %s28, 0
      %p297 = por %p295, %p296
      %p298 = scmp.ne.s32.totalorder %s286, %s287
      %p299 = scmp.eq.s32.totalorder %s29, 3
      %p300 = por %p298, %p299
      %p302 = scmp.ne.s32.totalorder %s287, %s301
      %p303 = scmp.eq.s32.totalorder %s29, 0
      %p304 = por %p302, %p303
      %s306 = sadd.s32 %s305, 1
      %p309 = scmp.eq.s32.totalorder %s23, 3
      %p310 = scmp.ne.s32.totalorder %s305, %s307
      %p311 = scmp.eq.s32.totalorder %s23, 0
      %p312 = por %p310, %p311
      %p313 = scmp.ne.s32.totalorder %s305, %s307
      %p314 = scmp.eq.s32.totalorder %s28, 3
      %p315 = por %p313, %p314
      %p316 = scmp.ne.s32.totalorder %s307, %s308
      %p317 = scmp.eq.s32.totalorder %s28, 0
      %p318 = por %p316, %p317
      %p319 = scmp.ne.s32.totalorder %s307, %s308
      %p320 = scmp.eq.s32.totalorder %s29, 3
      %p321 = por %p319, %p320
      %p323 = scmp.ne.s32.totalorder %s308, %s322
      %p324 = scmp.eq.s32.totalorder %s29, 0
      %p325 = por %p323, %p324
      %s327 = sadd.s32 %s326, 1
      %p330 = scmp.eq.s32.totalorder %s23, 3
      %p331 = scmp.ne.s32.totalorder %s326, %s328
      %p332 = scmp.eq.s32.totalorder %s23, 0
      %p333 = por %p331, %p332
      %p334 = scmp.ne.s32.totalorder %s326, %s328
      %p335 = scmp.eq.s32.totalorder %s28, 3
      %p336 = por %p334, %p335
      %p337 = scmp.ne.s32.totalorder %s328, %s329
      %p338 = scmp.eq.s32.totalorder %s28, 0
      %p339 = por %p337, %p338
      %p340 = scmp.ne.s32.totalorder %s328, %s329
      %p341 = scmp.eq.s32.totalorder %s29, 3
      %p342 = por %p340, %p341
      %p344 = scmp.ne.s32.totalorder %s329, %s343
      %p345 = scmp.eq.s32.totalorder %s29, 0
      %p346 = por %p344, %p345
      %s347 = ssub.s32 %s30, %s42
      %s348 = ssub.s32 %s31, %s38
      %s349 = sor.u32 %s347, %s348
      %p350 = scmp.eq.s32.totalorder %s349, 0
      %s352 = sadd.s32 %s351, 1
      %s353 = scalar_select %p350, %s351, %s352
      %p356 = pneg %p350
      %p357 = scmp.eq.s32.totalorder %s23, 3
      %p358 = por %p356, %p357
      %p359 = scmp.ne.s32.totalorder %s351, %s354
      %p360 = scmp.eq.s32.totalorder %s23, 0
      %p361 = por %p359, %p360
      %p362 = scmp.ne.s32.totalorder %s351, %s354
      %p363 = scmp.eq.s32.totalorder %s28, 3
      %p364 = por %p362, %p363
      %p365 = scmp.ne.s32.totalorder %s354, %s355
      %p366 = scmp.eq.s32.totalorder %s28, 0
      %p367 = por %p365, %p366
      %p368 = scmp.ne.s32.totalorder %s354, %s355
      %p369 = scmp.eq.s32.totalorder %s29, 3
      %p370 = por %p368, %p369
      %p372 = scmp.ne.s32.totalorder %s355, %s371
      %p373 = scmp.eq.s32.totalorder %s29, 0
      %p374 = por %p372, %p373
      %p375 = scmp.le.s32.totalorder 1, %s23
      %p376 = scmp.lt.s32.totalorder %s23, 5
      %p377 = pnand %p375, %p376
      %p378 = pneg %p377
      // Predicated region
      $region9: #{tpu_custom_call.1} parent=5 // pred_check
        _
      $region10: #{tpu_custom_call.1} parent=5 // pred_check_branch
        %380 = sbr.rel (%p377) target = $region12
      $region11: #{tpu_custom_call.1} parent=5 // pred_region
        %s381 = ssub.s32 %s23, 1
        // Predicated region
        $region13: #{tpu_custom_call.1} parent=11 // pred_check
          %p382 = pneg %p108
        $region14: #{tpu_custom_call.1} parent=11 // pred_check_branch
          %384 = sbr.rel (%p382) target = $region16
        $region15: #{tpu_custom_call.1} parent=11 // pred_region
          _
        $region16: #{tpu_custom_call.1} parent=11 // pred_fallthru
          _
        // Predicated region
        $region17: #{tpu_custom_call.1} parent=11 // pred_check
          %p385 = pneg %p129
        $region18: #{tpu_custom_call.1} parent=11 // pred_check_branch
          %387 = sbr.rel (%p385) target = $region20
        $region19: #{tpu_custom_call.1} parent=11 // pred_region
          _
        $region20: #{tpu_custom_call.1} parent=11 // pred_fallthru
          _
        // Predicated region
        $region21: #{tpu_custom_call.1} parent=11 // pred_check
          %p388 = pneg %p150
        $region22: #{tpu_custom_call.1} parent=11 // pred_check_branch
          %390 = sbr.rel (%p388) target = $region24
        $region23: #{tpu_custom_call.1} parent=11 // pred_region
          _
        $region24: #{tpu_custom_call.1} parent=11 // pred_fallthru
          _
        // Predicated region
        $region25: #{tpu_custom_call.1} parent=11 // pred_check
          %p391 = pneg %p171
        $region26: #{tpu_custom_call.1} parent=11 // pred_check_branch
          %393 = sbr.rel (%p391) target = $region28
        $region27: #{tpu_custom_call.1} parent=11 // pred_region
          _
        $region28: #{tpu_custom_call.1} parent=11 // pred_fallthru
          _
        // Predicated region
        $region29: #{tpu_custom_call.1} parent=11 // pred_check
          %p394 = pneg %p192
        $region30: #{tpu_custom_call.1} parent=11 // pred_check_branch
          %396 = sbr.rel (%p394) target = $region32
        $region31: #{tpu_custom_call.1} parent=11 // pred_region
          _
        $region32: #{tpu_custom_call.1} parent=11 // pred_fallthru
          _
        // Predicated region
        $region33: #{tpu_custom_call.1} parent=11 // pred_check
          %p397 = pneg %p213
        $region34: #{tpu_custom_call.1} parent=11 // pred_check_branch
          %399 = sbr.rel (%p397) target = $region36
        $region35: #{tpu_custom_call.1} parent=11 // pred_region
          _
        $region36: #{tpu_custom_call.1} parent=11 // pred_fallthru
          _
        // Predicated region
        $region37: #{tpu_custom_call.1} parent=11 // pred_check
          %p400 = pneg %p234
        $region38: #{tpu_custom_call.1} parent=11 // pred_check_branch
          %402 = sbr.rel (%p400) target = $region40
        $region39: #{tpu_custom_call.1} parent=11 // pred_region
          _
        $region40: #{tpu_custom_call.1} parent=11 // pred_fallthru
          _
        // Predicated region
        $region41: #{tpu_custom_call.1} parent=11 // pred_check
          %p403 = pneg %p255
        $region42: #{tpu_custom_call.1} parent=11 // pred_check_branch
          %405 = sbr.rel (%p403) target = $region44
        $region43: #{tpu_custom_call.1} parent=11 // pred_region
          _
        $region44: #{tpu_custom_call.1} parent=11 // pred_fallthru
          _
        // Predicated region
        $region45: #{tpu_custom_call.1} parent=11 // pred_check
          %p406 = pneg %p276
        $region46: #{tpu_custom_call.1} parent=11 // pred_check_branch
          %408 = sbr.rel (%p406) target = $region48
        $region47: #{tpu_custom_call.1} parent=11 // pred_region
          _
        $region48: #{tpu_custom_call.1} parent=11 // pred_fallthru
          _
        // Predicated region
        $region49: #{tpu_custom_call.1} parent=11 // pred_check
          %p409 = pneg %p297
        $region50: #{tpu_custom_call.1} parent=11 // pred_check_branch
          %411 = sbr.rel (%p409) target = $region52
        $region51: #{tpu_custom_call.1} parent=11 // pred_region
          _
        $region52: #{tpu_custom_call.1} parent=11 // pred_fallthru
          _
        // Predicated region
        $region53: #{tpu_custom_call.1} parent=11 // pred_check
          %p412 = pneg %p318
        $region54: #{tpu_custom_call.1} parent=11 // pred_check_branch
          %414 = sbr.rel (%p412) target = $region56
        $region55: #{tpu_custom_call.1} parent=11 // pred_region
          _
        $region56: #{tpu_custom_call.1} parent=11 // pred_fallthru
          _
        // Predicated region
        $region57: #{tpu_custom_call.1} parent=11 // pred_check
          %p415 = pneg %p339
        $region58: #{tpu_custom_call.1} parent=11 // pred_check_branch
          %417 = sbr.rel (%p415) target = $region60
        $region59: #{tpu_custom_call.1} parent=11 // pred_region
          _
        $region60: #{tpu_custom_call.1} parent=11 // pred_fallthru
          _
      $region12: #{tpu_custom_call.1} parent=5 // pred_fallthru
        _
      %p418 = scmp.lt.s32.totalorder %s23, 4
      // Predicated region
      $region61: #{tpu_custom_call.1} parent=5 // pred_check
        %p419 = pneg %p418
      $region62: #{tpu_custom_call.1} parent=5 // pred_check_branch
        %421 = sbr.rel (%p419) target = $region64
      $region63: #{tpu_custom_call.1} parent=5 // pred_region
        // Predicated region
        $region65: #{tpu_custom_call.1} parent=63 // pred_check
          %p422 = pneg %p55
        $region66: #{tpu_custom_call.1} parent=63 // pred_check_branch
          %424 = sbr.rel (%p422) target = $region68
        $region67: #{tpu_custom_call.1} parent=63 // pred_region
          %p425 = scmp.lt.s32.totalorder %s30, 1
          %s426 = scalar_select %p425, %s30, 1
          %s427 = smul.addr %s426, 8
          %s428 = scalar_lea.vmem %s0, %s427
        $region68: #{tpu_custom_call.1} parent=63 // pred_fallthru
          _
        // Predicated region
        $region69: #{tpu_custom_call.1} parent=63 // pred_check
          %p429 = pneg %p81
        $region70: #{tpu_custom_call.1} parent=63 // pred_check_branch
          %431 = sbr.rel (%p429) target = $region72
        $region71: #{tpu_custom_call.1} parent=63 // pred_region
          %s432 = smul.u32 16, %s31
          %p433 = scmp.lt.s32.totalorder %s432, 31
          %s434 = scalar_select %p433, %s432, 31
          %s435 = smul.addr %s434, 8
          %s436 = scalar_lea.vmem %s1, %s435
          %s437 = smul.u32 16, %s31
        $region72: #{tpu_custom_call.1} parent=63 // pred_fallthru
          _
      $region64: #{tpu_custom_call.1} parent=5 // pred_fallthru
        _
      %p438 = scmp.le.s32.totalorder 1, %s23
      %p439 = scmp.lt.s32.totalorder %s23, 5
      %p440 = pnand %p438, %p439
      %p441 = pneg %p440
      // Predicated region
      $region73: #{tpu_custom_call.1} parent=5 // pred_check
        _
      $region74: #{tpu_custom_call.1} parent=5 // pred_check_branch
        %443 = sbr.rel (%p440) target = $region76
      $region75: #{tpu_custom_call.1} parent=5 // pred_region
        %s444 = ssub.s32 %s23, 1
        %p445 = scmp.lt.s32.totalorder %s32, 1
        %s446 = scalar_select %p445, %s32, 1
        %s447 = smul.addr %s446, 8
        %s448 = scalar_lea.vmem %s0, %s447
        %p449 = pneg %p61
        %p450 = pneg %p58
        %s451 = smul.u32 16, %s33
        %p452 = scmp.lt.s32.totalorder %s451, 31
        %s453 = scalar_select %p452, %s451, 31
        %s454 = smul.addr %s453, 8
        %s455 = scalar_lea.vmem %s1, %s454
        %p456 = pneg %p87
        %p457 = pneg %p84
        %p458 = pneg %p108
        %p459 = pneg %p105
        %p460 = pneg %p129
        %p461 = pneg %p126
        %p462 = pneg %p150
        %p463 = pneg %p147
        %p464 = pneg %p171
        %p465 = pneg %p168
        %p466 = pneg %p192
        %p467 = pneg %p189
        %p468 = pneg %p213
        %p469 = pneg %p210
        %p470 = pneg %p234
        %p471 = pneg %p231
        %p472 = pneg %p255
        %p473 = pneg %p252
        %p474 = pneg %p276
        %p475 = pneg %p273
        %p476 = pneg %p297
        %p477 = pneg %p294
        %p478 = pneg %p318
        %p479 = pneg %p315
        %p480 = pneg %p339
        %p481 = pneg %p336
        %p482 = pneg %p367
        %p483 = pneg %p364
        %s484 = sand.u32 %s354, 1
        %s485 = scalar_lea.sflag [#allocation3], %s484
        %s486 = sand.u32 %s354, 1
        %s487 = smul.addr %s486, 16
        %s488 = scalar_lea.vmem [#allocation2], %s487
        %p489 = scmp.lt.s32.totalorder %s32, 1
        %s490 = scalar_select %p489, %s32, 1
        %s491 = smul.addr %s490, 8
        %s492 = scalar_lea.vmem %s0, %s491
        %s493 = smul.u32 16, %s33
        %p494 = scmp.lt.s32.totalorder %s493, 31
        %s495 = scalar_select %p494, %s493, 31
        %s496 = smul.addr %s495, 8
        %s497 = scalar_lea.vmem %s1, %s496
        %s498 = smul.u32 16, %s33
        %v499 = vld [vmem:[%s492] sm:$0xff]
        %v500 = vld [vmem:[%s2] sm:$0xff]
        %v501 = vld [vmem:[%s2 + $0x8] sm:$0xff]
        %v502 = vld [vmem:[%s3] sm:$0x1]
        %v504 = vlaneseq
        %v505 = vshrl.u32 %v504, 7
        %v506 = vsub.s32 0, %v505
        %v507 = vrot.slane %v502, %v506
        %vm509 = vcmask 130048
        %v511 = vsel %vm509, %v499, 0
        %513 = vmatprep.subr.mxu0 0.0
        %514 = vmatpush1.msra.mxu0 %v500
        %515 = vmatprep.subr.mxu0 0.0
        %516 = vmatpush1.msra.mxu0 %v501
        %517 = vmatprep.subr.mxu0 0.0
        %518 = vmatpush1.msra.mxu0 0.0
        %519 = vmatprep.subr.mxu0 0.0
        %520 = vmatpush1.msra.mxu0 0.0
        %521 = vmatprep.subr.mxu0 0.0
        %522 = vmatpush1.msra.mxu0 0.0
        %523 = vmatprep.subr.mxu0 0.0
        %524 = vmatpush1.msra.mxu0 0.0
        %525 = vmatprep.subr.mxu0 0.0
        %526 = vmatpush1.msra.mxu0 0.0
        %527 = vmatprep.subr.mxu0 0.0
        %528 = vmatpush1.msra.mxu0 0.0
        %529 = vmatprep.subr.mxu0 0.0
        %530 = vmatpush1.msra.mxu0 0.0
        %531 = vmatprep.subr.mxu0 0.0
        %532 = vmatpush1.msra.mxu0 0.0
        %533 = vmatprep.subr.mxu0 0.0
        %534 = vmatpush1.msra.mxu0 0.0
        %535 = vmatprep.subr.mxu0 0.0
        %536 = vmatpush1.msra.mxu0 0.0
        %537 = vmatprep.subr.mxu0 0.0
        %538 = vmatpush1.msra.mxu0 0.0
        %539 = vmatprep.subr.mxu0 0.0
        %540 = vmatpush1.msra.mxu0 0.0
        %541 = vmatprep.subr.mxu0 0.0
        %542 = vmatpush1.msra.mxu0 0.0
        %543 = vmatprep.subr.mxu0 0.0
        %544 = vmatpush1.msra.mxu0 0.0
        %545 = vmatprep.subr.mxu0 0.0
        %546 = vmatpush1.msra.mxu0 0.0
        %547 = vmatprep.subr.mxu0 0.0
        %548 = vmatpush1.msra.mxu0 0.0
        %549 = vmatprep.subr.mxu0 0.0
        %550 = vmatpush1.msra.mxu0 0.0
        %551 = vmatprep.subr.mxu0 0.0
        %552 = vmatpush1.msra.mxu0 0.0
        %553 = vmatprep.subr.mxu0 0.0
        %554 = vmatpush1.msra.mxu0 0.0
        %555 = vmatprep.subr.mxu0 0.0
        %556 = vmatpush1.msra.mxu0 0.0
        %557 = vmatprep.subr.mxu0 0.0
        %558 = vmatpush1.msra.mxu0 0.0
        %559 = vmatprep.subr.mxu0 0.0
        %560 = vmatpush1.msra.mxu0 0.0
        %561 = vmatprep.subr.mxu0 0.0
        %562 = vmatpush1.msra.mxu0 0.0
        %563 = vmatprep.subr.mxu0 0.0
        %564 = vmatpush1.msra.mxu0 0.0
        %565 = vmatprep.subr.mxu0 0.0
        %566 = vmatpush1.msra.mxu0 0.0
        %567 = vmatprep.subr.mxu0 0.0
        %568 = vmatpush1.msra.mxu0 0.0
        %569 = vmatprep.subr.mxu0 0.0
        %570 = vmatpush1.msra.mxu0 0.0
        %571 = vmatprep.subr.mxu0 0.0
        %572 = vmatpush1.msra.mxu0 0.0
        %573 = vmatprep.subr.mxu0 0.0
        %574 = vmatpush1.msra.mxu0 0.0
        %575 = vmatprep.subr.mxu0 0.0
        %576 = vmatpush1.msra.mxu0 0.0
        %577 = vmatprep.mubr.f32.mxu0 0.0
        %578 = vmatmul.mubr.f32.gmra.mrb[0].mxu0 %v511
        %v579 = vpop.f32.mrb[0].mxu0
        %v580 = vadd.f32 %v507, %v579
        %v581 = vpop.f32.mrb[0].mxu0
        %582 = vdwg.mxu0
        %v583 = vtanh.pop %v580
        %v584 = vld [vmem:[%s4] sm:$0xff]
        %v585 = vld [vmem:[%s4 + $0x8] sm:$0xff]
        %v586 = vld [vmem:[%s4 + $0x10] sm:$0xff]
        %v587 = vld [vmem:[%s4 + $0x18] sm:$0xff]
        %v588 = vld [vmem:[%s5] sm:$0x1]
        %v590 = vlaneseq
        %v591 = vshrl.u32 %v590, 7
        %v592 = vsub.s32 0, %v591
        %v593 = vrot.slane %v588, %v592
        %vm595 = vcmask 261120
        %v597 = vsel %vm595, %v583, 0
        %599 = vmatprep.subr.mxu0 0.0
        %600 = vmatpush1.msra.mxu0 %v584
        %601 = vmatprep.subr.mxu0 0.0
        %602 = vmatpush1.msra.mxu0 %v585
        %603 = vmatprep.subr.mxu0 0.0
        %604 = vmatpush1.msra.mxu0 %v586
        %605 = vmatprep.subr.mxu0 0.0
        %606 = vmatpush1.msra.mxu0 %v587
        %607 = vmatprep.subr.mxu0 0.0
        %608 = vmatpush1.msra.mxu0 0.0
        %609 = vmatprep.subr.mxu0 0.0
        %610 = vmatpush1.msra.mxu0 0.0
        %611 = vmatprep.subr.mxu0 0.0
        %612 = vmatpush1.msra.mxu0 0.0
        %613 = vmatprep.subr.mxu0 0.0
        %614 = vmatpush1.msra.mxu0 0.0
        %615 = vmatprep.subr.mxu0 0.0
        %616 = vmatpush1.msra.mxu0 0.0
        %617 = vmatprep.subr.mxu0 0.0
        %618 = vmatpush1.msra.mxu0 0.0
        %619 = vmatprep.subr.mxu0 0.0
        %620 = vmatpush1.msra.mxu0 0.0
        %621 = vmatprep.subr.mxu0 0.0
        %622 = vmatpush1.msra.mxu0 0.0
        %623 = vmatprep.subr.mxu0 0.0
        %624 = vmatpush1.msra.mxu0 0.0
        %625 = vmatprep.subr.mxu0 0.0
        %626 = vmatpush1.msra.mxu0 0.0
        %627 = vmatprep.subr.mxu0 0.0
        %628 = vmatpush1.msra.mxu0 0.0
        %629 = vmatprep.subr.mxu0 0.0
        %630 = vmatpush1.msra.mxu0 0.0
        %631 = vmatprep.subr.mxu0 0.0
        %632 = vmatpush1.msra.mxu0 0.0
        %633 = vmatprep.subr.mxu0 0.0
        %634 = vmatpush1.msra.mxu0 0.0
        %635 = vmatprep.subr.mxu0 0.0
        %636 = vmatpush1.msra.mxu0 0.0
        %637 = vmatprep.subr.mxu0 0.0
        %638 = vmatpush1.msra.mxu0 0.0
        %639 = vmatprep.subr.mxu0 0.0
        %640 = vmatpush1.msra.mxu0 0.0
        %641 = vmatprep.subr.mxu0 0.0
        %642 = vmatpush1.msra.mxu0 0.0
        %643 = vmatprep.subr.mxu0 0.0
        %644 = vmatpush1.msra.mxu0 0.0
        %645 = vmatprep.subr.mxu0 0.0
        %646 = vmatpush1.msra.mxu0 0.0
        %647 = vmatprep.subr.mxu0 0.0
        %648 = vmatpush1.msra.mxu0 0.0
        %649 = vmatprep.subr.mxu0 0.0
        %650 = vmatpush1.msra.mxu0 0.0
        %651 = vmatprep.subr.mxu0 0.0
        %652 = vmatpush1.msra.mxu0 0.0
        %653 = vmatprep.subr.mxu0 0.0
        %654 = vmatpush1.msra.mxu0 0.0
        %655 = vmatprep.subr.mxu0 0.0
        %656 = vmatpush1.msra.mxu0 0.0
        %657 = vmatprep.subr.mxu0 0.0
        %658 = vmatpush1.msra.mxu0 0.0
        %659 = vmatprep.subr.mxu0 0.0
        %660 = vmatpush1.msra.mxu0 0.0
        %661 = vmatprep.subr.mxu0 0.0
        %662 = vmatpush1.msra.mxu0 0.0
        %663 = vmatprep.mubr.f32.mxu0 0.0
        %664 = vmatmul.mubr.f32.gmra.mrb[0].mxu0 %v597
        %v665 = vpop.f32.mrb[0].mxu0
        %v666 = vadd.f32 %v593, %v665
        %v667 = vpop.f32.mrb[0].mxu0
        %668 = vdwg.mxu0
        %v669 = vtanh.pop %v666
        %v670 = vld [vmem:[%s497] sm:$0xff]
        %v671 = vld [vmem:[%s497 + $0x8] sm:$0xff]
        %v672 = vld [vmem:[%s497 + $0x10] sm:$0xff]
        %v673 = vld [vmem:[%s497 + $0x18] sm:$0xff]
        %v674 = vld [vmem:[%s497 + $0x20] sm:$0xff]
        %v675 = vld [vmem:[%s497 + $0x28] sm:$0xff]
        %v676 = vld [vmem:[%s497 + $0x30] sm:$0xff]
        %v677 = vld [vmem:[%s497 + $0x38] sm:$0xff]
        %v678 = vld [vmem:[%s497 + $0x40] sm:$0xff]
        %v679 = vld [vmem:[%s497 + $0x48] sm:$0xff]
        %v680 = vld [vmem:[%s497 + $0x50] sm:$0xff]
        %v681 = vld [vmem:[%s497 + $0x58] sm:$0xff]
        %v682 = vld [vmem:[%s497 + $0x60] sm:$0xff]
        %v683 = vld [vmem:[%s497 + $0x68] sm:$0xff]
        %v684 = vld [vmem:[%s497 + $0x70] sm:$0xff]
        %v685 = vld [vmem:[%s497 + $0x78] sm:$0xff]
        %v686 = vld [vmem:[%s8] sm:$0x3]
        %v687 = vld [vmem:[%s9] sm:$0x1]
        %v689 = vlaneseq
        %v690 = vshrl.u32 %v689, 7
        %v691 = vsub.s32 0, %v690
        %v692 = vrot.slane %v687, %v691
        %vm694 = vcmask 15360
        %v696 = vsel %vm694, %v670, 0
        %v699 = vsel %vm694, %v671, 0
        %v702 = vsel %vm694, %v672, 0
        %v705 = vsel %vm694, %v673, 0
        %v708 = vsel %vm694, %v674, 0
        %v711 = vsel %vm694, %v675, 0
        %v714 = vsel %vm694, %v676, 0
        %v717 = vsel %vm694, %v677, 0
        %v720 = vsel %vm694, %v678, 0
        %v723 = vsel %vm694, %v679, 0
        %v726 = vsel %vm694, %v680, 0
        %v729 = vsel %vm694, %v681, 0
        %v732 = vsel %vm694, %v682, 0
        %v735 = vsel %vm694, %v683, 0
        %v738 = vsel %vm694, %v684, 0
        %v741 = vsel %vm694, %v685, 0
        %vm743 = vcmask 1041408
        %v745 = vsel %vm743, %v686, 0
        %747 = vmatprep.subr.mxu0 0.0
        %748 = vmatpush1.msra.mxu0 %v745
        %749 = vmatprep.subr.mxu0 0.0
        %750 = vmatpush1.msra.mxu0 0.0
        %751 = vmatprep.subr.mxu0 0.0
        %752 = vmatpush1.msra.mxu0 0.0
        %753 = vmatprep.subr.mxu0 0.0
        %754 = vmatpush1.msra.mxu0 0.0
        %755 = vmatprep.subr.mxu0 0.0
        %756 = vmatpush1.msra.mxu0 0.0
        %757 = vmatprep.subr.mxu0 0.0
        %758 = vmatpush1.msra.mxu0 0.0
        %759 = vmatprep.subr.mxu0 0.0
        %760 = vmatpush1.msra.mxu0 0.0
        %761 = vmatprep.subr.mxu0 0.0
        %762 = vmatpush1.msra.mxu0 0.0
        %763 = vmatprep.subr.mxu0 0.0
        %764 = vmatpush1.msra.mxu0 0.0
        %765 = vmatprep.subr.mxu0 0.0
        %766 = vmatpush1.msra.mxu0 0.0
        %767 = vmatprep.subr.mxu0 0.0
        %768 = vmatpush1.msra.mxu0 0.0
        %769 = vmatprep.subr.mxu0 0.0
        %770 = vmatpush1.msra.mxu0 0.0
        %771 = vmatprep.subr.mxu0 0.0
        %772 = vmatpush1.msra.mxu0 0.0
        %773 = vmatprep.subr.mxu0 0.0
        %774 = vmatpush1.msra.mxu0 0.0
        %775 = vmatprep.subr.mxu0 0.0
        %776 = vmatpush1.msra.mxu0 0.0
        %777 = vmatprep.subr.mxu0 0.0
        %778 = vmatpush1.msra.mxu0 0.0
        %779 = vmatprep.subr.mxu0 0.0
        %780 = vmatpush1.msra.mxu0 0.0
        %781 = vmatprep.subr.mxu0 0.0
        %782 = vmatpush1.msra.mxu0 0.0
        %783 = vmatprep.subr.mxu0 0.0
        %784 = vmatpush1.msra.mxu0 0.0
        %785 = vmatprep.subr.mxu0 0.0
        %786 = vmatpush1.msra.mxu0 0.0
        %787 = vmatprep.subr.mxu0 0.0
        %788 = vmatpush1.msra.mxu0 0.0
        %789 = vmatprep.subr.mxu0 0.0
        %790 = vmatpush1.msra.mxu0 0.0
        %791 = vmatprep.subr.mxu0 0.0
        %792 = vmatpush1.msra.mxu0 0.0
        %793 = vmatprep.subr.mxu0 0.0
        %794 = vmatpush1.msra.mxu0 0.0
        %795 = vmatprep.subr.mxu0 0.0
        %796 = vmatpush1.msra.mxu0 0.0
        %797 = vmatprep.subr.mxu0 0.0
        %798 = vmatpush1.msra.mxu0 0.0
        %799 = vmatprep.subr.mxu0 0.0
        %800 = vmatpush1.msra.mxu0 0.0
        %801 = vmatprep.subr.mxu0 0.0
        %802 = vmatpush1.msra.mxu0 0.0
        %803 = vmatprep.subr.mxu0 0.0
        %804 = vmatpush1.msra.mxu0 0.0
        %805 = vmatprep.subr.mxu0 0.0
        %806 = vmatpush1.msra.mxu0 0.0
        %807 = vmatprep.subr.mxu0 0.0
        %808 = vmatpush1.msra.mxu0 0.0
        %809 = vmatprep.subr.mxu0 0.0
        %810 = vmatpush1.msra.mxu0 0.0
        %811 = vmatprep.mubr.f32.mxu0 0.0
        %812 = vmatmul.mubr.f32.gmra.mrb[0].mxu0 %v696
        %v813 = vpop.f32.mrb[0].mxu0
        %v814 = vadd.f32 %v692, %v813
        %v815 = vpop.f32.mrb[0].mxu0
        %816 = vmatprep.mubr.f32.mxu0 0.0
        %817 = vmatmul.mubr.f32.gmra.mrb[0].mxu0 %v699
        %v818 = vpop.f32.mrb[0].mxu0
        %v819 = vadd.f32 %v692, %v818
        %v820 = vpop.f32.mrb[0].mxu0
        %821 = vmatprep.mubr.f32.mxu0 0.0
        %822 = vmatmul.mubr.f32.gmra.mrb[0].mxu0 %v702
        %v823 = vpop.f32.mrb[0].mxu0
        %v824 = vadd.f32 %v692, %v823
        %v825 = vpop.f32.mrb[0].mxu0
        %826 = vmatprep.mubr.f32.mxu0 0.0
        %827 = vmatmul.mubr.f32.gmra.mrb[0].mxu0 %v705
        %v828 = vpop.f32.mrb[0].mxu0
        %v829 = vadd.f32 %v692, %v828
        %v830 = vpop.f32.mrb[0].mxu0
        %831 = vmatprep.mubr.f32.mxu0 0.0
        %832 = vmatmul.mubr.f32.gmra.mrb[0].mxu0 %v708
        %v833 = vpop.f32.mrb[0].mxu0
        %v834 = vadd.f32 %v692, %v833
        %v835 = vpop.f32.mrb[0].mxu0
        %836 = vmatprep.mubr.f32.mxu0 0.0
        %837 = vmatmul.mubr.f32.gmra.mrb[0].mxu0 %v711
        %v838 = vpop.f32.mrb[0].mxu0
        %v839 = vadd.f32 %v692, %v838
        %v840 = vpop.f32.mrb[0].mxu0
        %841 = vmatprep.mubr.f32.mxu0 0.0
        %842 = vmatmul.mubr.f32.gmra.mrb[0].mxu0 %v714
        %v843 = vpop.f32.mrb[0].mxu0
        %v844 = vadd.f32 %v692, %v843
        %v845 = vpop.f32.mrb[0].mxu0
        %846 = vmatprep.mubr.f32.mxu0 0.0
        %847 = vmatmul.mubr.f32.gmra.mrb[0].mxu0 %v717
        %v848 = vpop.f32.mrb[0].mxu0
        %v849 = vadd.f32 %v692, %v848
        %v850 = vpop.f32.mrb[0].mxu0
        %851 = vmatprep.mubr.f32.mxu0 0.0
        %852 = vmatmul.mubr.f32.gmra.mrb[0].mxu0 %v720
        %v853 = vpop.f32.mrb[0].mxu0
        %v854 = vadd.f32 %v692, %v853
        %v855 = vpop.f32.mrb[0].mxu0
        %856 = vmatprep.mubr.f32.mxu0 0.0
        %857 = vmatmul.mubr.f32.gmra.mrb[0].mxu0 %v723
        %v858 = vpop.f32.mrb[0].mxu0
        %v859 = vadd.f32 %v692, %v858
        %v860 = vpop.f32.mrb[0].mxu0
        %861 = vmatprep.mubr.f32.mxu0 0.0
        %862 = vmatmul.mubr.f32.gmra.mrb[0].mxu0 %v726
        %v863 = vpop.f32.mrb[0].mxu0
        %v864 = vadd.f32 %v692, %v863
        %v865 = vpop.f32.mrb[0].mxu0
        %866 = vmatprep.mubr.f32.mxu0 0.0
        %867 = vmatmul.mubr.f32.gmra.mrb[0].mxu0 %v729
        %v868 = vpop.f32.mrb[0].mxu0
        %v869 = vadd.f32 %v692, %v868
        %v870 = vpop.f32.mrb[0].mxu0
        %871 = vmatprep.mubr.f32.mxu0 0.0
        %872 = vmatmul.mubr.f32.gmra.mrb[0].mxu0 %v732
        %v873 = vpop.f32.mrb[0].mxu0
        %v874 = vadd.f32 %v692, %v873
        %v875 = vpop.f32.mrb[0].mxu0
        %876 = vmatprep.mubr.f32.mxu0 0.0
        %877 = vmatmul.mubr.f32.gmra.mrb[0].mxu0 %v735
        %v878 = vpop.f32.mrb[0].mxu0
        %v879 = vadd.f32 %v692, %v878
        %v880 = vpop.f32.mrb[0].mxu0
        %881 = vmatprep.mubr.f32.mxu0 0.0
        %882 = vmatmul.mubr.f32.gmra.mrb[0].mxu0 %v738
        %v883 = vpop.f32.mrb[0].mxu0
        %v884 = vadd.f32 %v692, %v883
        %v885 = vpop.f32.mrb[0].mxu0
        %886 = vmatprep.mubr.f32.mxu0 0.0
        %887 = vmatmul.mubr.f32.gmra.mrb[0].mxu0 %v741
        %v888 = vpop.f32.mrb[0].mxu0
        %v889 = vadd.f32 %v692, %v888
        %v890 = vpop.f32.mrb[0].mxu0
        %891 = vdwg.mxu0
        %v892 = vtanh.pop %v814
        %v893 = vtanh.pop %v819
        %v894 = vtanh.pop %v824
        %v895 = vtanh.pop %v829
        %v896 = vtanh.pop %v834
        %v897 = vtanh.pop %v839
        %v898 = vtanh.pop %v844
        %v899 = vtanh.pop %v849
        %v900 = vtanh.pop %v854
        %v901 = vtanh.pop %v859
        %v902 = vtanh.pop %v864
        %v903 = vtanh.pop %v869
        %v904 = vtanh.pop %v874
        %v905 = vtanh.pop %v879
        %v906 = vtanh.pop %v884
        %v907 = vtanh.pop %v889
        %v908 = vld [vmem:[%s10] sm:$0xff]
        %v909 = vld [vmem:[%s10 + $0x8] sm:$0xff]
        %v910 = vld [vmem:[%s10 + $0x10] sm:$0xff]
        %v911 = vld [vmem:[%s10 + $0x18] sm:$0xff]
        %v912 = vld [vmem:[%s11] sm:$0x1]
        %v914 = vlaneseq
        %v915 = vshrl.u32 %v914, 7
        %v916 = vsub.s32 0, %v915
        %v917 = vrot.slane %v912, %v916
        %v920 = vsel %vm595, %v892, 0
        %v923 = vsel %vm595, %v893, 0
        %v926 = vsel %vm595, %v894, 0
        %v929 = vsel %vm595, %v895, 0
        %v932 = vsel %vm595, %v896, 0
        %v935 = vsel %vm595, %v897, 0
        %v938 = vsel %vm595, %v898, 0
        %v941 = vsel %vm595, %v899, 0
        %v944 = vsel %vm595, %v900, 0
        %v947 = vsel %vm595, %v901, 0
        %v950 = vsel %vm595, %v902, 0
        %v953 = vsel %vm595, %v903, 0
        %v956 = vsel %vm595, %v904, 0
        %v959 = vsel %vm595, %v905, 0
        %v962 = vsel %vm595, %v906, 0
        %v965 = vsel %vm595, %v907, 0
        %967 = vmatprep.subr.mxu0 0.0
        %968 = vmatpush1.msra.mxu0 %v908
        %969 = vmatprep.subr.mxu0 0.0
        %970 = vmatpush1.msra.mxu0 %v909
        %971 = vmatprep.subr.mxu0 0.0
        %972 = vmatpush1.msra.mxu0 %v910
        %973 = vmatprep.subr.mxu0 0.0
        %974 = vmatpush1.msra.mxu0 %v911
        %975 = vmatprep.subr.mxu0 0.0
        %976 = vmatpush1.msra.mxu0 0.0
        %977 = vmatprep.subr.mxu0 0.0
        %978 = vmatpush1.msra.mxu0 0.0
        %979 = vmatprep.subr.mxu0 0.0
        %980 = vmatpush1.msra.mxu0 0.0
        %981 = vmatprep.subr.mxu0 0.0
        %982 = vmatpush1.msra.mxu0 0.0
        %983 = vmatprep.subr.mxu0 0.0
        %984 = vmatpush1.msra.mxu0 0.0
        %985 = vmatprep.subr.mxu0 0.0
        %986 = vmatpush1.msra.mxu0 0.0
        %987 = vmatprep.subr.mxu0 0.0
        %988 = vmatpush1.msra.mxu0 0.0
        %989 = vmatprep.subr.mxu0 0.0
        %990 = vmatpush1.msra.mxu0 0.0
        %991 = vmatprep.subr.mxu0 0.0
        %992 = vmatpush1.msra.mxu0 0.0
        %993 = vmatprep.subr.mxu0 0.0
        %994 = vmatpush1.msra.mxu0 0.0
        %995 = vmatprep.subr.mxu0 0.0
        %996 = vmatpush1.msra.mxu0 0.0
        %997 = vmatprep.subr.mxu0 0.0
        %998 = vmatpush1.msra.mxu0 0.0
        %999 = vmatprep.subr.mxu0 0.0
        %1000 = vmatpush1.msra.mxu0 0.0
        %1001 = vmatprep.subr.mxu0 0.0
        %1002 = vmatpush1.msra.mxu0 0.0
        %1003 = vmatprep.subr.mxu0 0.0
        %1004 = vmatpush1.msra.mxu0 0.0
        %1005 = vmatprep.subr.mxu0 0.0
        %1006 = vmatpush1.msra.mxu0 0.0
        %1007 = vmatprep.subr.mxu0 0.0
        %1008 = vmatpush1.msra.mxu0 0.0
        %1009 = vmatprep.subr.mxu0 0.0
        %1010 = vmatpush1.msra.mxu0 0.0
        %1011 = vmatprep.subr.mxu0 0.0
        %1012 = vmatpush1.msra.mxu0 0.0
        %1013 = vmatprep.subr.mxu0 0.0
        %1014 = vmatpush1.msra.mxu0 0.0
        %1015 = vmatprep.subr.mxu0 0.0
        %1016 = vmatpush1.msra.mxu0 0.0
        %1017 = vmatprep.subr.mxu0 0.0
        %1018 = vmatpush1.msra.mxu0 0.0
        %1019 = vmatprep.subr.mxu0 0.0
        %1020 = vmatpush1.msra.mxu0 0.0
        %1021 = vmatprep.subr.mxu0 0.0
        %1022 = vmatpush1.msra.mxu0 0.0
        %1023 = vmatprep.subr.mxu0 0.0
        %1024 = vmatpush1.msra.mxu0 0.0
        %1025 = vmatprep.subr.mxu0 0.0
        %1026 = vmatpush1.msra.mxu0 0.0
        %1027 = vmatprep.subr.mxu0 0.0
        %1028 = vmatpush1.msra.mxu0 0.0
        %1029 = vmatprep.subr.mxu0 0.0
        %1030 = vmatpush1.msra.mxu0 0.0
        %1031 = vmatprep.mubr.f32.mxu0 0.0
        %1032 = vmatmul.mubr.f32.gmra.mrb[0].mxu0 %v920
        %v1033 = vpop.f32.mrb[0].mxu0
        %v1034 = vadd.f32 %v917, %v1033
        %v1035 = vpop.f32.mrb[0].mxu0
        %1036 = vmatprep.mubr.f32.mxu0 0.0
        %1037 = vmatmul.mubr.f32.gmra.mrb[0].mxu0 %v923
        %v1038 = vpop.f32.mrb[0].mxu0
        %v1039 = vadd.f32 %v917, %v1038
        %v1040 = vpop.f32.mrb[0].mxu0
        %1041 = vmatprep.mubr.f32.mxu0 0.0
        %1042 = vmatmul.mubr.f32.gmra.mrb[0].mxu0 %v926
        %v1043 = vpop.f32.mrb[0].mxu0
        %v1044 = vadd.f32 %v917, %v1043
        %v1045 = vpop.f32.mrb[0].mxu0
        %1046 = vmatprep.mubr.f32.mxu0 0.0
        %1047 = vmatmul.mubr.f32.gmra.mrb[0].mxu0 %v929
        %v1048 = vpop.f32.mrb[0].mxu0
        %v1049 = vadd.f32 %v917, %v1048
        %v1050 = vpop.f32.mrb[0].mxu0
        %1051 = vmatprep.mubr.f32.mxu0 0.0
        %1052 = vmatmul.mubr.f32.gmra.mrb[0].mxu0 %v932
        %v1053 = vpop.f32.mrb[0].mxu0
        %v1054 = vadd.f32 %v917, %v1053
        %v1055 = vpop.f32.mrb[0].mxu0
        %1056 = vmatprep.mubr.f32.mxu0 0.0
        %1057 = vmatmul.mubr.f32.gmra.mrb[0].mxu0 %v935
        %v1058 = vpop.f32.mrb[0].mxu0
        %v1059 = vadd.f32 %v917, %v1058
        %v1060 = vpop.f32.mrb[0].mxu0
        %1061 = vmatprep.mubr.f32.mxu0 0.0
        %1062 = vmatmul.mubr.f32.gmra.mrb[0].mxu0 %v938
        %v1063 = vpop.f32.mrb[0].mxu0
        %v1064 = vadd.f32 %v917, %v1063
        %v1065 = vpop.f32.mrb[0].mxu0
        %1066 = vmatprep.mubr.f32.mxu0 0.0
        %1067 = vmatmul.mubr.f32.gmra.mrb[0].mxu0 %v941
        %v1068 = vpop.f32.mrb[0].mxu0
        %v1069 = vadd.f32 %v917, %v1068
        %v1070 = vpop.f32.mrb[0].mxu0
        %1071 = vmatprep.mubr.f32.mxu0 0.0
        %1072 = vmatmul.mubr.f32.gmra.mrb[0].mxu0 %v944
        %v1073 = vpop.f32.mrb[0].mxu0
        %v1074 = vadd.f32 %v917, %v1073
        %v1075 = vpop.f32.mrb[0].mxu0
        %1076 = vmatprep.mubr.f32.mxu0 0.0
        %1077 = vmatmul.mubr.f32.gmra.mrb[0].mxu0 %v947
        %v1078 = vpop.f32.mrb[0].mxu0
        %v1079 = vadd.f32 %v917, %v1078
        %v1080 = vpop.f32.mrb[0].mxu0
        %1081 = vmatprep.mubr.f32.mxu0 0.0
        %1082 = vmatmul.mubr.f32.gmra.mrb[0].mxu0 %v950
        %v1083 = vpop.f32.mrb[0].mxu0
        %v1084 = vadd.f32 %v917, %v1083
        %v1085 = vpop.f32.mrb[0].mxu0
        %1086 = vmatprep.mubr.f32.mxu0 0.0
        %1087 = vmatmul.mubr.f32.gmra.mrb[0].mxu0 %v953
        %v1088 = vpop.f32.mrb[0].mxu0
        %v1089 = vadd.f32 %v917, %v1088
        %v1090 = vpop.f32.mrb[0].mxu0
        %1091 = vmatprep.mubr.f32.mxu0 0.0
        %1092 = vmatmul.mubr.f32.gmra.mrb[0].mxu0 %v956
        %v1093 = vpop.f32.mrb[0].mxu0
        %v1094 = vadd.f32 %v917, %v1093
        %v1095 = vpop.f32.mrb[0].mxu0
        %1096 = vmatprep.mubr.f32.mxu0 0.0
        %1097 = vmatmul.mubr.f32.gmra.mrb[0].mxu0 %v959
        %v1098 = vpop.f32.mrb[0].mxu0
        %v1099 = vadd.f32 %v917, %v1098
        %v1100 = vpop.f32.mrb[0].mxu0
        %1101 = vmatprep.mubr.f32.mxu0 0.0
        %1102 = vmatmul.mubr.f32.gmra.mrb[0].mxu0 %v962
        %v1103 = vpop.f32.mrb[0].mxu0
        %v1104 = vadd.f32 %v917, %v1103
        %v1105 = vpop.f32.mrb[0].mxu0
        %1106 = vmatprep.mubr.f32.mxu0 0.0
        %1107 = vmatmul.mubr.f32.gmra.mrb[0].mxu0 %v965
        %v1108 = vpop.f32.mrb[0].mxu0
        %v1109 = vadd.f32 %v917, %v1108
        %v1110 = vpop.f32.mrb[0].mxu0
        %1111 = vdwg.mxu0
        %v1112 = vtanh.pop %v1034
        %v1113 = vtanh.pop %v1039
        %v1114 = vtanh.pop %v1044
        %v1115 = vtanh.pop %v1049
        %v1116 = vtanh.pop %v1054
        %v1117 = vtanh.pop %v1059
        %v1118 = vtanh.pop %v1064
        %v1119 = vtanh.pop %v1069
        %v1120 = vtanh.pop %v1074
        %v1121 = vtanh.pop %v1079
        %v1122 = vtanh.pop %v1084
        %v1123 = vtanh.pop %v1089
        %v1124 = vtanh.pop %v1094
        %v1125 = vtanh.pop %v1099
        %v1126 = vtanh.pop %v1104
        %v1127 = vtanh.pop %v1109
        %v1128 = vld [vmem:[%s12] sm:$0xff]
        %v1129 = vld [vmem:[%s12 + $0x8] sm:$0xff]
        %v1130 = vld [vmem:[%s12 + $0x10] sm:$0xff]
        %v1131 = vld [vmem:[%s12 + $0x18] sm:$0xff]
        %v1132 = vld [vmem:[%s13] sm:$0x1]
        %v1134 = vlaneseq
        %v1135 = vshrl.u32 %v1134, 7
        %v1136 = vsub.s32 0, %v1135
        %v1137 = vrot.slane %v1132, %v1136
        %v1140 = vsel %vm595, %v1112, 0
        %v1143 = vsel %vm595, %v1113, 0
        %v1146 = vsel %vm595, %v1114, 0
        %v1149 = vsel %vm595, %v1115, 0
        %v1152 = vsel %vm595, %v1116, 0
        %v1155 = vsel %vm595, %v1117, 0
        %v1158 = vsel %vm595, %v1118, 0
        %v1161 = vsel %vm595, %v1119, 0
        %v1164 = vsel %vm595, %v1120, 0
        %v1167 = vsel %vm595, %v1121, 0
        %v1170 = vsel %vm595, %v1122, 0
        %v1173 = vsel %vm595, %v1123, 0
        %v1176 = vsel %vm595, %v1124, 0
        %v1179 = vsel %vm595, %v1125, 0
        %v1182 = vsel %vm595, %v1126, 0
        %v1185 = vsel %vm595, %v1127, 0
        %1187 = vmatprep.subr.mxu0 0.0
        %1188 = vmatpush1.msra.mxu0 %v1128
        %1189 = vmatprep.subr.mxu0 0.0
        %1190 = vmatpush1.msra.mxu0 %v1129
        %1191 = vmatprep.subr.mxu0 0.0
        %1192 = vmatpush1.msra.mxu0 %v1130
        %1193 = vmatprep.subr.mxu0 0.0
        %1194 = vmatpush1.msra.mxu0 %v1131
        %1195 = vmatprep.subr.mxu0 0.0
        %1196 = vmatpush1.msra.mxu0 0.0
        %1197 = vmatprep.subr.mxu0 0.0
        %1198 = vmatpush1.msra.mxu0 0.0
        %1199 = vmatprep.subr.mxu0 0.0
        %1200 = vmatpush1.msra.mxu0 0.0
        %1201 = vmatprep.subr.mxu0 0.0
        %1202 = vmatpush1.msra.mxu0 0.0
        %1203 = vmatprep.subr.mxu0 0.0
        %1204 = vmatpush1.msra.mxu0 0.0
        %1205 = vmatprep.subr.mxu0 0.0
        %1206 = vmatpush1.msra.mxu0 0.0
        %1207 = vmatprep.subr.mxu0 0.0
        %1208 = vmatpush1.msra.mxu0 0.0
        %1209 = vmatprep.subr.mxu0 0.0
        %1210 = vmatpush1.msra.mxu0 0.0
        %1211 = vmatprep.subr.mxu0 0.0
        %1212 = vmatpush1.msra.mxu0 0.0
        %1213 = vmatprep.subr.mxu0 0.0
        %1214 = vmatpush1.msra.mxu0 0.0
        %1215 = vmatprep.subr.mxu0 0.0
        %1216 = vmatpush1.msra.mxu0 0.0
        %1217 = vmatprep.subr.mxu0 0.0
        %1218 = vmatpush1.msra.mxu0 0.0
        %1219 = vmatprep.subr.mxu0 0.0
        %1220 = vmatpush1.msra.mxu0 0.0
        %1221 = vmatprep.subr.mxu0 0.0
        %1222 = vmatpush1.msra.mxu0 0.0
        %1223 = vmatprep.subr.mxu0 0.0
        %1224 = vmatpush1.msra.mxu0 0.0
        %1225 = vmatprep.subr.mxu0 0.0
        %1226 = vmatpush1.msra.mxu0 0.0
        %1227 = vmatprep.subr.mxu0 0.0
        %1228 = vmatpush1.msra.mxu0 0.0
        %1229 = vmatprep.subr.mxu0 0.0
        %1230 = vmatpush1.msra.mxu0 0.0
        %1231 = vmatprep.subr.mxu0 0.0
        %1232 = vmatpush1.msra.mxu0 0.0
        %1233 = vmatprep.subr.mxu0 0.0
        %1234 = vmatpush1.msra.mxu0 0.0
        %1235 = vmatprep.subr.mxu0 0.0
        %1236 = vmatpush1.msra.mxu0 0.0
        %1237 = vmatprep.subr.mxu0 0.0
        %1238 = vmatpush1.msra.mxu0 0.0
        %1239 = vmatprep.subr.mxu0 0.0
        %1240 = vmatpush1.msra.mxu0 0.0
        %1241 = vmatprep.subr.mxu0 0.0
        %1242 = vmatpush1.msra.mxu0 0.0
        %1243 = vmatprep.subr.mxu0 0.0
        %1244 = vmatpush1.msra.mxu0 0.0
        %1245 = vmatprep.subr.mxu0 0.0
        %1246 = vmatpush1.msra.mxu0 0.0
        %1247 = vmatprep.subr.mxu0 0.0
        %1248 = vmatpush1.msra.mxu0 0.0
        %1249 = vmatprep.subr.mxu0 0.0
        %1250 = vmatpush1.msra.mxu0 0.0
        %1251 = vmatprep.mubr.f32.mxu0 0.0
        %1252 = vmatmul.mubr.f32.gmra.mrb[0].mxu0 %v1140
        %v1253 = vpop.f32.mrb[0].mxu0
        %v1254 = vadd.f32 %v1137, %v1253
        %v1255 = vpop.f32.mrb[0].mxu0
        %1256 = vmatprep.mubr.f32.mxu0 0.0
        %1257 = vmatmul.mubr.f32.gmra.mrb[0].mxu0 %v1143
        %v1258 = vpop.f32.mrb[0].mxu0
        %v1259 = vadd.f32 %v1137, %v1258
        %v1260 = vpop.f32.mrb[0].mxu0
        %1261 = vmatprep.mubr.f32.mxu0 0.0
        %1262 = vmatmul.mubr.f32.gmra.mrb[0].mxu0 %v1146
        %v1263 = vpop.f32.mrb[0].mxu0
        %v1264 = vadd.f32 %v1137, %v1263
        %v1265 = vpop.f32.mrb[0].mxu0
        %1266 = vmatprep.mubr.f32.mxu0 0.0
        %1267 = vmatmul.mubr.f32.gmra.mrb[0].mxu0 %v1149
        %v1268 = vpop.f32.mrb[0].mxu0
        %v1269 = vadd.f32 %v1137, %v1268
        %v1270 = vpop.f32.mrb[0].mxu0
        %1271 = vmatprep.mubr.f32.mxu0 0.0
        %1272 = vmatmul.mubr.f32.gmra.mrb[0].mxu0 %v1152
        %v1273 = vpop.f32.mrb[0].mxu0
        %v1274 = vadd.f32 %v1137, %v1273
        %v1275 = vpop.f32.mrb[0].mxu0
        %1276 = vmatprep.mubr.f32.mxu0 0.0
        %1277 = vmatmul.mubr.f32.gmra.mrb[0].mxu0 %v1155
        %v1278 = vpop.f32.mrb[0].mxu0
        %v1279 = vadd.f32 %v1137, %v1278
        %v1280 = vpop.f32.mrb[0].mxu0
        %1281 = vmatprep.mubr.f32.mxu0 0.0
        %1282 = vmatmul.mubr.f32.gmra.mrb[0].mxu0 %v1158
        %v1283 = vpop.f32.mrb[0].mxu0
        %v1284 = vadd.f32 %v1137, %v1283
        %v1285 = vpop.f32.mrb[0].mxu0
        %1286 = vmatprep.mubr.f32.mxu0 0.0
        %1287 = vmatmul.mubr.f32.gmra.mrb[0].mxu0 %v1161
        %v1288 = vpop.f32.mrb[0].mxu0
        %v1289 = vadd.f32 %v1137, %v1288
        %v1290 = vpop.f32.mrb[0].mxu0
        %1291 = vmatprep.mubr.f32.mxu0 0.0
        %1292 = vmatmul.mubr.f32.gmra.mrb[0].mxu0 %v1164
        %v1293 = vpop.f32.mrb[0].mxu0
        %v1294 = vadd.f32 %v1137, %v1293
        %v1295 = vpop.f32.mrb[0].mxu0
        %1296 = vmatprep.mubr.f32.mxu0 0.0
        %1297 = vmatmul.mubr.f32.gmra.mrb[0].mxu0 %v1167
        %v1298 = vpop.f32.mrb[0].mxu0
        %v1299 = vadd.f32 %v1137, %v1298
        %v1300 = vpop.f32.mrb[0].mxu0
        %1301 = vmatprep.mubr.f32.mxu0 0.0
        %1302 = vmatmul.mubr.f32.gmra.mrb[0].mxu0 %v1170
        %v1303 = vpop.f32.mrb[0].mxu0
        %v1304 = vadd.f32 %v1137, %v1303
        %v1305 = vpop.f32.mrb[0].mxu0
        %1306 = vmatprep.mubr.f32.mxu0 0.0
        %1307 = vmatmul.mubr.f32.gmra.mrb[0].mxu0 %v1173
        %v1308 = vpop.f32.mrb[0].mxu0
        %v1309 = vadd.f32 %v1137, %v1308
        %v1310 = vpop.f32.mrb[0].mxu0
        %1311 = vmatprep.mubr.f32.mxu0 0.0
        %1312 = vmatmul.mubr.f32.gmra.mrb[0].mxu0 %v1176
        %v1313 = vpop.f32.mrb[0].mxu0
        %v1314 = vadd.f32 %v1137, %v1313
        %v1315 = vpop.f32.mrb[0].mxu0
        %1316 = vmatprep.mubr.f32.mxu0 0.0
        %1317 = vmatmul.mubr.f32.gmra.mrb[0].mxu0 %v1179
        %v1318 = vpop.f32.mrb[0].mxu0
        %v1319 = vadd.f32 %v1137, %v1318
        %v1320 = vpop.f32.mrb[0].mxu0
        %1321 = vmatprep.mubr.f32.mxu0 0.0
        %1322 = vmatmul.mubr.f32.gmra.mrb[0].mxu0 %v1182
        %v1323 = vpop.f32.mrb[0].mxu0
        %v1324 = vadd.f32 %v1137, %v1323
        %v1325 = vpop.f32.mrb[0].mxu0
        %1326 = vmatprep.mubr.f32.mxu0 0.0
        %1327 = vmatmul.mubr.f32.gmra.mrb[0].mxu0 %v1185
        %v1328 = vpop.f32.mrb[0].mxu0
        %v1329 = vadd.f32 %v1137, %v1328
        %v1330 = vpop.f32.mrb[0].mxu0
        %1331 = vdwg.mxu0
        %v1332 = vtanh.pop %v1254
        %v1333 = vtanh.pop %v1259
        %v1334 = vtanh.pop %v1264
        %v1335 = vtanh.pop %v1269
        %v1336 = vtanh.pop %v1274
        %v1337 = vtanh.pop %v1279
        %v1338 = vtanh.pop %v1284
        %v1339 = vtanh.pop %v1289
        %v1340 = vtanh.pop %v1294
        %v1341 = vtanh.pop %v1299
        %v1342 = vtanh.pop %v1304
        %v1343 = vtanh.pop %v1309
        %v1344 = vtanh.pop %v1314
        %v1345 = vtanh.pop %v1319
        %v1346 = vtanh.pop %v1324
        %v1347 = vtanh.pop %v1329
        %v1348 = vld [vmem:[%s6] sm:$0xff]
        %v1349 = vld [vmem:[%s6 + $0x8] sm:$0xff]
        %v1350 = vld [vmem:[%s6 + $0x10] sm:$0xff]
        %v1351 = vld [vmem:[%s6 + $0x18] sm:$0xff]
        %v1352 = vld [vmem:[%s7] sm:$0x1]
        %v1354 = vlaneseq
        %v1355 = vshrl.u32 %v1354, 7
        %v1356 = vsub.s32 0, %v1355
        %v1357 = vrot.slane %v1352, %v1356
        %v1360 = vsel %vm595, %v669, 0
        %1362 = vmatprep.subr.mxu0 0.0
        %1363 = vmatpush1.msra.mxu0 %v1348
        %1364 = vmatprep.subr.mxu0 0.0
        %1365 = vmatpush1.msra.mxu0 %v1349
        %1366 = vmatprep.subr.mxu0 0.0
        %1367 = vmatpush1.msra.mxu0 %v1350
        %1368 = vmatprep.subr.mxu0 0.0
        %1369 = vmatpush1.msra.mxu0 %v1351
        %1370 = vmatprep.subr.mxu0 0.0
        %1371 = vmatpush1.msra.mxu0 0.0
        %1372 = vmatprep.subr.mxu0 0.0
        %1373 = vmatpush1.msra.mxu0 0.0
        %1374 = vmatprep.subr.mxu0 0.0
        %1375 = vmatpush1.msra.mxu0 0.0
        %1376 = vmatprep.subr.mxu0 0.0
        %1377 = vmatpush1.msra.mxu0 0.0
        %1378 = vmatprep.subr.mxu0 0.0
        %1379 = vmatpush1.msra.mxu0 0.0
        %1380 = vmatprep.subr.mxu0 0.0
        %1381 = vmatpush1.msra.mxu0 0.0
        %1382 = vmatprep.subr.mxu0 0.0
        %1383 = vmatpush1.msra.mxu0 0.0
        %1384 = vmatprep.subr.mxu0 0.0
        %1385 = vmatpush1.msra.mxu0 0.0
        %1386 = vmatprep.subr.mxu0 0.0
        %1387 = vmatpush1.msra.mxu0 0.0
        %1388 = vmatprep.subr.mxu0 0.0
        %1389 = vmatpush1.msra.mxu0 0.0
        %1390 = vmatprep.subr.mxu0 0.0
        %1391 = vmatpush1.msra.mxu0 0.0
        %1392 = vmatprep.subr.mxu0 0.0
        %1393 = vmatpush1.msra.mxu0 0.0
        %1394 = vmatprep.subr.mxu0 0.0
        %1395 = vmatpush1.msra.mxu0 0.0
        %1396 = vmatprep.subr.mxu0 0.0
        %1397 = vmatpush1.msra.mxu0 0.0
        %1398 = vmatprep.subr.mxu0 0.0
        %1399 = vmatpush1.msra.mxu0 0.0
        %1400 = vmatprep.subr.mxu0 0.0
        %1401 = vmatpush1.msra.mxu0 0.0
        %1402 = vmatprep.subr.mxu0 0.0
        %1403 = vmatpush1.msra.mxu0 0.0
        %1404 = vmatprep.subr.mxu0 0.0
        %1405 = vmatpush1.msra.mxu0 0.0
        %1406 = vmatprep.subr.mxu0 0.0
        %1407 = vmatpush1.msra.mxu0 0.0
        %1408 = vmatprep.subr.mxu0 0.0
        %1409 = vmatpush1.msra.mxu0 0.0
        %1410 = vmatprep.subr.mxu0 0.0
        %1411 = vmatpush1.msra.mxu0 0.0
        %1412 = vmatprep.subr.mxu0 0.0
        %1413 = vmatpush1.msra.mxu0 0.0
        %1414 = vmatprep.subr.mxu0 0.0
        %1415 = vmatpush1.msra.mxu0 0.0
        %1416 = vmatprep.subr.mxu0 0.0
        %1417 = vmatpush1.msra.mxu0 0.0
        %1418 = vmatprep.subr.mxu0 0.0
        %1419 = vmatpush1.msra.mxu0 0.0
        %1420 = vmatprep.subr.mxu0 0.0
        %1421 = vmatpush1.msra.mxu0 0.0
        %1422 = vmatprep.subr.mxu0 0.0
        %1423 = vmatpush1.msra.mxu0 0.0
        %1424 = vmatprep.subr.mxu0 0.0
        %1425 = vmatpush1.msra.mxu0 0.0
        %1426 = vmatprep.mubr.f32.mxu0 0.0
        %1427 = vmatmul.mubr.f32.gmra.mrb[0].mxu0 %v1360
        %v1428 = vpop.f32.mrb[0].mxu0
        %v1429 = vadd.f32 %v1357, %v1428
        %v1430 = vpop.f32.mrb[0].mxu0
        %1431 = vdwg.mxu0
        %v1433 = vsel %vm694, %v1429, 0
        %v1436 = vsel %vm694, %v1332, 0
        %v1439 = vsel %vm694, %v1333, 0
        %v1442 = vsel %vm694, %v1334, 0
        %v1445 = vsel %vm694, %v1335, 0
        %v1448 = vsel %vm694, %v1336, 0
        %v1451 = vsel %vm694, %v1337, 0
        %v1454 = vsel %vm694, %v1338, 0
        %v1457 = vsel %vm694, %v1339, 0
        %v1460 = vsel %vm694, %v1340, 0
        %v1463 = vsel %vm694, %v1341, 0
        %v1466 = vsel %vm694, %v1342, 0
        %v1469 = vsel %vm694, %v1343, 0
        %v1472 = vsel %vm694, %v1344, 0
        %v1475 = vsel %vm694, %v1345, 0
        %v1478 = vsel %vm694, %v1346, 0
        %v1481 = vsel %vm694, %v1347, 0
        %1483 = vmatprep.subr.mxu0 0.0
        %1484 = vmatpush1.xpose.msra.mxu0 %v1436
        %1485 = vmatprep.subr.mxu0 0.0
        %1486 = vmatpush1.xpose.msra.mxu0 %v1439
        %1487 = vmatprep.subr.mxu0 0.0
        %1488 = vmatpush1.xpose.msra.mxu0 %v1442
        %1489 = vmatprep.subr.mxu0 0.0
        %1490 = vmatpush1.xpose.msra.mxu0 %v1445
        %1491 = vmatprep.subr.mxu0 0.0
        %1492 = vmatpush1.xpose.msra.mxu0 %v1448
        %1493 = vmatprep.subr.mxu0 0.0
        %1494 = vmatpush1.xpose.msra.mxu0 %v1451
        %1495 = vmatprep.subr.mxu0 0.0
        %1496 = vmatpush1.xpose.msra.mxu0 %v1454
        %1497 = vmatprep.subr.mxu0 0.0
        %1498 = vmatpush1.xpose.msra.mxu0 %v1457
        %1499 = vmatprep.subr.mxu0 0.0
        %1500 = vmatpush1.xpose.msra.mxu0 %v1460
        %1501 = vmatprep.subr.mxu0 0.0
        %1502 = vmatpush1.xpose.msra.mxu0 %v1463
        %1503 = vmatprep.subr.mxu0 0.0
        %1504 = vmatpush1.xpose.msra.mxu0 %v1466
        %1505 = vmatprep.subr.mxu0 0.0
        %1506 = vmatpush1.xpose.msra.mxu0 %v1469
        %1507 = vmatprep.subr.mxu0 0.0
        %1508 = vmatpush1.xpose.msra.mxu0 %v1472
        %1509 = vmatprep.subr.mxu0 0.0
        %1510 = vmatpush1.xpose.msra.mxu0 %v1475
        %1511 = vmatprep.subr.mxu0 0.0
        %1512 = vmatpush1.xpose.msra.mxu0 %v1478
        %1513 = vmatprep.subr.mxu0 0.0
        %1514 = vmatpush1.xpose.msra.mxu0 %v1481
        %1515 = vmatprep.subr.mxu0 0.0
        %1516 = vmatpush1.xpose.msra.mxu0 0.0
        %1517 = vmatprep.subr.mxu0 0.0
        %1518 = vmatpush1.xpose.msra.mxu0 0.0
        %1519 = vmatprep.subr.mxu0 0.0
        %1520 = vmatpush1.xpose.msra.mxu0 0.0
        %1521 = vmatprep.subr.mxu0 0.0
        %1522 = vmatpush1.xpose.msra.mxu0 0.0
        %1523 = vmatprep.subr.mxu0 0.0
        %1524 = vmatpush1.xpose.msra.mxu0 0.0
        %1525 = vmatprep.subr.mxu0 0.0
        %1526 = vmatpush1.xpose.msra.mxu0 0.0
        %1527 = vmatprep.subr.mxu0 0.0
        %1528 = vmatpush1.xpose.msra.mxu0 0.0
        %1529 = vmatprep.subr.mxu0 0.0
        %1530 = vmatpush1.xpose.msra.mxu0 0.0
        %1531 = vmatprep.subr.mxu0 0.0
        %1532 = vmatpush1.xpose.msra.mxu0 0.0
        %1533 = vmatprep.subr.mxu0 0.0
        %1534 = vmatpush1.xpose.msra.mxu0 0.0
        %1535 = vmatprep.subr.mxu0 0.0
        %1536 = vmatpush1.xpose.msra.mxu0 0.0
        %1537 = vmatprep.subr.mxu0 0.0
        %1538 = vmatpush1.xpose.msra.mxu0 0.0
        %1539 = vmatprep.subr.mxu0 0.0
        %1540 = vmatpush1.xpose.msra.mxu0 0.0
        %1541 = vmatprep.subr.mxu0 0.0
        %1542 = vmatpush1.xpose.msra.mxu0 0.0
        %1543 = vmatprep.subr.mxu0 0.0
        %1544 = vmatpush1.xpose.msra.mxu0 0.0
        %1545 = vmatprep.subr.mxu0 0.0
        %1546 = vmatpush1.xpose.msra.mxu0 0.0
        %1547 = vmatprep.mubr.f32.mxu0 0.0
        %1548 = vmatmul.mubr.f32.gmra.mrb[0].mxu0 %v1433
        %v1549 = vpop.f32.mrb[0].mxu0
        %v1550 = vadd.f32 0.0, %v1549
        %v1551 = vpop.f32.mrb[0].mxu0
        %1552 = vdwg.mxu0
        %1553 = vst [vmem:[%s488] sm:$0xff] %v1550
        %v1554 = vld [vmem:[%s6] sm:$0xff]
        %v1555 = vld [vmem:[%s6 + $0x8] sm:$0xff]
        %v1556 = vld [vmem:[%s6 + $0x10] sm:$0xff]
        %v1557 = vld [vmem:[%s6 + $0x18] sm:$0xff]
        %v1558 = vld [vmem:[%s7] sm:$0x1]
        %v1560 = vlaneseq
        %v1561 = vshrl.u32 %v1560, 7
        %v1562 = vsub.s32 0, %v1561
        %v1563 = vrot.slane %v1558, %v1562
        %1568 = vrot.lane.b32.xlu0 %v1554, 126
        %v1569 = vpop.permute.xlu0 %1568
        %1570 = vrot.lane.b32.xlu0 %v1555, 126
        %v1571 = vpop.permute.xlu0 %1570
        %1572 = vrot.lane.b32.xlu0 %v1556, 126
        %v1573 = vpop.permute.xlu0 %1572
        %1574 = vrot.lane.b32.xlu0 %v1557, 126
        %v1575 = vpop.permute.xlu0 %1574
        %1580 = vrot.lane.b32.xlu0 %v1563, 126
        %v1581 = vpop.permute.xlu0 %1580
        %1583 = vmatprep.subr.mxu0 0.0
        %1584 = vmatpush1.msra.mxu0 %v1569
        %1585 = vmatprep.subr.mxu0 0.0
        %1586 = vmatpush1.msra.mxu0 %v1571
        %1587 = vmatprep.subr.mxu0 0.0
        %1588 = vmatpush1.msra.mxu0 %v1573
        %1589 = vmatprep.subr.mxu0 0.0
        %1590 = vmatpush1.msra.mxu0 %v1575
        %1591 = vmatprep.subr.mxu0 0.0
        %1592 = vmatpush1.msra.mxu0 0.0
        %1593 = vmatprep.subr.mxu0 0.0
        %1594 = vmatpush1.msra.mxu0 0.0
        %1595 = vmatprep.subr.mxu0 0.0
        %1596 = vmatpush1.msra.mxu0 0.0
        %1597 = vmatprep.subr.mxu0 0.0
        %1598 = vmatpush1.msra.mxu0 0.0
        %1599 = vmatprep.subr.mxu0 0.0
        %1600 = vmatpush1.msra.mxu0 0.0
        %1601 = vmatprep.subr.mxu0 0.0
        %1602 = vmatpush1.msra.mxu0 0.0
        %1603 = vmatprep.subr.mxu0 0.0
        %1604 = vmatpush1.msra.mxu0 0.0
        %1605 = vmatprep.subr.mxu0 0.0
        %1606 = vmatpush1.msra.mxu0 0.0
        %1607 = vmatprep.subr.mxu0 0.0
        %1608 = vmatpush1.msra.mxu0 0.0
        %1609 = vmatprep.subr.mxu0 0.0
        %1610 = vmatpush1.msra.mxu0 0.0
        %1611 = vmatprep.subr.mxu0 0.0
        %1612 = vmatpush1.msra.mxu0 0.0
        %1613 = vmatprep.subr.mxu0 0.0
        %1614 = vmatpush1.msra.mxu0 0.0
        %1615 = vmatprep.subr.mxu0 0.0
        %1616 = vmatpush1.msra.mxu0 0.0
        %1617 = vmatprep.subr.mxu0 0.0
        %1618 = vmatpush1.msra.mxu0 0.0
        %1619 = vmatprep.subr.mxu0 0.0
        %1620 = vmatpush1.msra.mxu0 0.0
        %1621 = vmatprep.subr.mxu0 0.0
        %1622 = vmatpush1.msra.mxu0 0.0
        %1623 = vmatprep.subr.mxu0 0.0
        %1624 = vmatpush1.msra.mxu0 0.0
        %1625 = vmatprep.subr.mxu0 0.0
        %1626 = vmatpush1.msra.mxu0 0.0
        %1627 = vmatprep.subr.mxu0 0.0
        %1628 = vmatpush1.msra.mxu0 0.0
        %1629 = vmatprep.subr.mxu0 0.0
        %1630 = vmatpush1.msra.mxu0 0.0
        %1631 = vmatprep.subr.mxu0 0.0
        %1632 = vmatpush1.msra.mxu0 0.0
        %1633 = vmatprep.subr.mxu0 0.0
        %1634 = vmatpush1.msra.mxu0 0.0
        %1635 = vmatprep.subr.mxu0 0.0
        %1636 = vmatpush1.msra.mxu0 0.0
        %1637 = vmatprep.subr.mxu0 0.0
        %1638 = vmatpush1.msra.mxu0 0.0
        %1639 = vmatprep.subr.mxu0 0.0
        %1640 = vmatpush1.msra.mxu0 0.0
        %1641 = vmatprep.subr.mxu0 0.0
        %1642 = vmatpush1.msra.mxu0 0.0
        %1643 = vmatprep.subr.mxu0 0.0
        %1644 = vmatpush1.msra.mxu0 0.0
        %1645 = vmatprep.subr.mxu0 0.0
        %1646 = vmatpush1.msra.mxu0 0.0
        %1647 = vmatprep.mubr.f32.mxu0 0.0
        %1648 = vmatmul.mubr.f32.gmra.mrb[0].mxu0 %v1360
        %v1649 = vpop.f32.mrb[0].mxu0
        %v1650 = vadd.f32 %v1581, %v1649
        %v1651 = vpop.f32.mrb[0].mxu0
        %1652 = vdwg.mxu0
        %v1654 = vsel %vm694, %v1650, 0
        %1656 = vmatprep.subr.mxu0 0.0
        %1657 = vmatpush1.xpose.msra.mxu0 %v1436
        %1658 = vmatprep.subr.mxu0 0.0
        %1659 = vmatpush1.xpose.msra.mxu0 %v1439
        %1660 = vmatprep.subr.mxu0 0.0
        %1661 = vmatpush1.xpose.msra.mxu0 %v1442
        %1662 = vmatprep.subr.mxu0 0.0
        %1663 = vmatpush1.xpose.msra.mxu0 %v1445
        %1664 = vmatprep.subr.mxu0 0.0
        %1665 = vmatpush1.xpose.msra.mxu0 %v1448
        %1666 = vmatprep.subr.mxu0 0.0
        %1667 = vmatpush1.xpose.msra.mxu0 %v1451
        %1668 = vmatprep.subr.mxu0 0.0
        %1669 = vmatpush1.xpose.msra.mxu0 %v1454
        %1670 = vmatprep.subr.mxu0 0.0
        %1671 = vmatpush1.xpose.msra.mxu0 %v1457
        %1672 = vmatprep.subr.mxu0 0.0
        %1673 = vmatpush1.xpose.msra.mxu0 %v1460
        %1674 = vmatprep.subr.mxu0 0.0
        %1675 = vmatpush1.xpose.msra.mxu0 %v1463
        %1676 = vmatprep.subr.mxu0 0.0
        %1677 = vmatpush1.xpose.msra.mxu0 %v1466
        %1678 = vmatprep.subr.mxu0 0.0
        %1679 = vmatpush1.xpose.msra.mxu0 %v1469
        %1680 = vmatprep.subr.mxu0 0.0
        %1681 = vmatpush1.xpose.msra.mxu0 %v1472
        %1682 = vmatprep.subr.mxu0 0.0
        %1683 = vmatpush1.xpose.msra.mxu0 %v1475
        %1684 = vmatprep.subr.mxu0 0.0
        %1685 = vmatpush1.xpose.msra.mxu0 %v1478
        %1686 = vmatprep.subr.mxu0 0.0
        %1687 = vmatpush1.xpose.msra.mxu0 %v1481
        %1688 = vmatprep.subr.mxu0 0.0
        %1689 = vmatpush1.xpose.msra.mxu0 0.0
        %1690 = vmatprep.subr.mxu0 0.0
        %1691 = vmatpush1.xpose.msra.mxu0 0.0
        %1692 = vmatprep.subr.mxu0 0.0
        %1693 = vmatpush1.xpose.msra.mxu0 0.0
        %1694 = vmatprep.subr.mxu0 0.0
        %1695 = vmatpush1.xpose.msra.mxu0 0.0
        %1696 = vmatprep.subr.mxu0 0.0
        %1697 = vmatpush1.xpose.msra.mxu0 0.0
        %1698 = vmatprep.subr.mxu0 0.0
        %1699 = vmatpush1.xpose.msra.mxu0 0.0
        %1700 = vmatprep.subr.mxu0 0.0
        %1701 = vmatpush1.xpose.msra.mxu0 0.0
        %1702 = vmatprep.subr.mxu0 0.0
        %1703 = vmatpush1.xpose.msra.mxu0 0.0
        %1704 = vmatprep.subr.mxu0 0.0
        %1705 = vmatpush1.xpose.msra.mxu0 0.0
        %1706 = vmatprep.subr.mxu0 0.0
        %1707 = vmatpush1.xpose.msra.mxu0 0.0
        %1708 = vmatprep.subr.mxu0 0.0
        %1709 = vmatpush1.xpose.msra.mxu0 0.0
        %1710 = vmatprep.subr.mxu0 0.0
        %1711 = vmatpush1.xpose.msra.mxu0 0.0
        %1712 = vmatprep.subr.mxu0 0.0
        %1713 = vmatpush1.xpose.msra.mxu0 0.0
        %1714 = vmatprep.subr.mxu0 0.0
        %1715 = vmatpush1.xpose.msra.mxu0 0.0
        %1716 = vmatprep.subr.mxu0 0.0
        %1717 = vmatpush1.xpose.msra.mxu0 0.0
        %1718 = vmatprep.subr.mxu0 0.0
        %1719 = vmatpush1.xpose.msra.mxu0 0.0
        %1720 = vmatprep.mubr.f32.mxu0 0.0
        %1721 = vmatmul.mubr.f32.gmra.mrb[0].mxu0 %v1654
        %v1722 = vpop.f32.mrb[0].mxu0
        %v1723 = vadd.f32 0.0, %v1722
        %v1724 = vpop.f32.mrb[0].mxu0
        %1725 = vdwg.mxu0
        %s1726 = scalar_lea.vmem %s488, 8 [#allocation2]
        %1727 = vst [vmem:[%s1726] sm:$0xff] %v1723
        %s1728 = sand.u32 %s354, 1
        %s1729 = scalar_lea.sflag [#allocation3], %s1728
        %s1730 = sand.u32 %s354, 1
        %s1731 = smul.addr %s1730, 16
        %s1732 = scalar_lea.vmem [#allocation2], %s1731
        // Predicated region
        $region77: #{tpu_custom_call.1} parent=75 // pred_check
          %p1733 = pneg %p364
        $region78: #{tpu_custom_call.1} parent=75 // pred_check_branch
          %1735 = sbr.rel (%p1733) target = $region80
        $region79: #{tpu_custom_call.1} parent=75 // pred_region
          %s1737 = ssub.s32 256, 256
          %1738 = vsyncadd %s1729, %s1737
          %s1739 = smul.addr %s32, 2
          %s1740 = sadd.s32 %s33, %s1739
          %s1741 = smul.addr %s1740, 128
          %s1742 = scalar_lea.hbm %s14, %s1741
          %s1743 = sshll.u32 %s1732, 4
          %s1744 = int_to_ptr.vmem [resolvable:$true] %s1743
          %1749 = dma.vmem_to_hbm [thread:$0]  %s1744, 256, %s1742, %s1729, 128, 512, 8
        $region80: #{tpu_custom_call.1} parent=75 // pred_fallthru
          _
      $region76: #{tpu_custom_call.1} parent=5 // pred_fallthru
        _
      %p1750 = scmp.le.s32.totalorder 2, %s23
      // Predicated region
      $region81: #{tpu_custom_call.1} parent=5 // pred_check
        %p1751 = pneg %p1750
      $region82: #{tpu_custom_call.1} parent=5 // pred_check_branch
        %1753 = sbr.rel (%p1751) target = $region84
      $region83: #{tpu_custom_call.1} parent=5 // pred_region
        %s1754 = ssub.s32 %s23, 2
        // Predicated region
        $region85: #{tpu_custom_call.1} parent=83 // pred_check
          %p1755 = pneg %p370
        $region86: #{tpu_custom_call.1} parent=83 // pred_check_branch
          %1757 = sbr.rel (%p1755) target = $region88
        $region87: #{tpu_custom_call.1} parent=83 // pred_region
          %s1758 = sand.u32 %s355, 1
          %s1759 = scalar_lea.sflag [#allocation3], %s1758
          %s1760 = sand.u32 %s355, 1
          %s1761 = smul.addr %s1760, 16
          %s1762 = scalar_lea.vmem [#allocation2], %s1761
          %1763 = dma.done %s1759, 256
        $region88: #{tpu_custom_call.1} parent=83 // pred_fallthru
          _
      $region84: #{tpu_custom_call.1} parent=5 // pred_fallthru
        _
    $region6: #{tpu_custom_call.1} parent=1 // loop_footer
      %s27 = sadd.s32 1, %s23
    $region7: #{tpu_custom_call.1} parent=1 // loop_footer_branch
      %22 = sbr.rel target = $region3
    $region8: #{tpu_custom_call.1} parent=1 // loop_exit
      _
    %1764 = vsyncpa [#allocation3], 1
    %s1765 = scalar_lea.sflag [#allocation3], 1
    %1766 = vsyncpa %s1765, 1

</llo_original>
